<compile_context>
chip_gen: v7x
topology: tpu7x:2x2x1
jax: 0.10.0
libtpu: 0.0.40
codegen_flags: <defaults>
</compile_context>

<pallas_src>
import functools

import jax
import jax.numpy as jnp
from jax.experimental import pallas as pl
from jax.experimental.pallas import tpu as pltpu

STATIC_NUM_LAYERS = [64, 128, 128, 64, 32]   # hidden widths L0..L4
IN_FEATURES = 7
OUT_FEATURES = 1

NUM_LAYERS = len(STATIC_NUM_LAYERS) + 1      # 6 linear layers total


def _round_up(a, m):
    return ((a + m - 1) // m) * m


IN_PAD = _round_up(IN_FEATURES, 8)           # 7 -> 8 (sublane multiple)


def _mlp_kernel(x_ref, *refs):
    """Fused 6-layer MLP, transposed layout: activations are (features, batch).

    x_ref:  (IN_PAD, batch_block) bf16, x^T with zero-padded rows 7..
    refs:   w0, b0, w1, b1, ..., w5, b5, o_ref
            w_l: (out_pad_l, in_pad_l) bf16 (W_l^T, zero-padded)
            b_l: (out_pad_l, 1) f32
            o_ref: (1, batch_block) f32, lane-dense output row
    """
    o_ref = refs[-1]
    prm = refs[:-1]
    n_layers = len(prm) // 2

    h = x_ref[...]                            # (8, B) bf16
    for l in range(n_layers):
        w = prm[2 * l][...]                   # (out_pad, in_pad) bf16
        b = prm[2 * l + 1][...]               # (out_pad, 1) f32
        z = jnp.dot(w, h, preferred_element_type=jnp.float32) + b
        if l < n_layers - 1:
            h = jnp.maximum(z, 0.0).astype(jnp.bfloat16)
        else:
            # Only row 0 of the (8, B) padded output is the real scalar output.
            o_ref[...] = z[0:1, :].astype(o_ref.dtype)


def pack_params(params):
    """Pack (W:(in,out), b:(1,out)) params into per-layer padded bf16/f32 slabs.

    Returns a list of (W^T padded to (round8(out), round8(in)) bf16,
                       b padded to (round8(out), 1) f32).
    Hoist this out of the per-call path: pack once, reuse every forward.
    """
    packed = []
    for w, b in params:
        fin, fout = w.shape
        fin_p, fout_p = _round_up(fin, 8), _round_up(fout, 8)
        wt = jnp.zeros((fout_p, fin_p), jnp.bfloat16)
        wt = wt.at[:fout, :fin].set(w.T.astype(jnp.bfloat16))
        bp = jnp.zeros((fout_p, 1), jnp.float32)
        bp = bp.at[:fout, 0].set(b.reshape(-1).astype(jnp.float32))
        packed.append((wt, bp))
    return packed


def static_surrogate_forward(x, packed, *, batch_block=2048):
    """Run the fused MLP kernel.

    x:           (N, 7) float32
    packed:      output of pack_params
    batch_block: rows per grid step (primary tuning knob; 1024-4096 typical).
    """
    N = x.shape[0]
    assert x.shape[1] == IN_FEATURES

    # Clamp the block size: keep >= 2 grid blocks whenever N allows so the
    # "parallel" grid axis feeds both TensorCores on v7x; keep a multiple of 128.
    min_blocks = 2 if N > 128 else 1
    bb = min(int(batch_block), _round_up(-(-N // min_blocks), 128))
    bb = max(_round_up(bb, 128), 128)
    n_blocks = -(-N // bb)
    n_pad = n_blocks * bb

    # Transposed, zero-padded, bf16 input: (IN_PAD, n_pad).  Under jit this pad +
    # transpose fuses into the same program (no separate relayout launch).
    xt = jnp.zeros((IN_PAD, n_pad), jnp.bfloat16)
    xt = xt.at[:IN_FEATURES, :N].set(x.T.astype(jnp.bfloat16))

    in_specs = [pl.BlockSpec((IN_PAD, bb), lambda i: (0, i))]
    param_args = []
    for wt, bp in packed:
        param_args += [wt, bp]
        # Full-array blocks with constant index_map: DMA'd once, VMEM-resident.
        in_specs.append(pl.BlockSpec(wt.shape, lambda i: (0, 0)))
        in_specs.append(pl.BlockSpec(bp.shape, lambda i: (0, 0)))

    # Cost estimate aligned with the *actual* padded work executed.
    padded_macs = sum(int(wt.shape[0]) * int(wt.shape[1]) for wt, _ in packed)
    param_bytes = sum(2 * wt.size + 4 * bp.size for wt, bp in packed)
    cost = pl.CostEstimate(
        flops=2 * n_pad * padded_macs,
        transcendentals=0,
        bytes_accessed=2 * xt.size + 4 * n_pad + int(param_bytes),
    )

    # Raise the scoped-VMEM cap only when big batch blocks need it (v5e default
    # is 16 MiB; v6e/v7x default 32 MiB).
    vmem_limit = 48 * 1024 * 1024 if bb >= 2048 else None

    out = pl.pallas_call(
        _mlp_kernel,
        out_shape=jax.ShapeDtypeStruct((n_blocks, 1, bb), jnp.float32),
        grid_spec=pltpu.PrefetchScalarGridSpec(
            num_scalar_prefetch=0,
            grid=(n_blocks,),
            in_specs=in_specs,
            # Lane-dense output row per block; leading block axis squeezed.
            out_specs=pl.BlockSpec((None, 1, bb), lambda i: (i, 0, 0)),
        ),
        compiler_params=pltpu.CompilerParams(
            dimension_semantics=("parallel",),
            vmem_limit_bytes=vmem_limit,
        ),
        cost_estimate=cost,
    )(xt, *param_args)

    # (n_blocks, 1, bb) -> (n_pad, 1) -> drop padded rows.
    return out.reshape(n_pad, OUT_FEATURES)[:N]


def init_params(key):
    """Deterministic synthetic params matching the nn.Linear shapes.

    He-style init keeps activations O(1) through the net so the bf16-vs-f32
    comparison below is a meaningful structural check.  torch stores weight as
    (out, in); we keep the mathematically equivalent (in, out) so y = x @ W + b.
    """
    dims = [IN_FEATURES] + STATIC_NUM_LAYERS + [OUT_FEATURES]
    params = []
    for i in range(len(dims) - 1):
        fan_in, fan_out = dims[i], dims[i + 1]
        key, kw, kb = jax.random.split(key, 3)
        w = jax.random.normal(kw, (fan_in, fan_out), jnp.float32) * jnp.sqrt(2.0 / fan_in)
        b = jax.random.normal(kb, (1, fan_out), jnp.float32) * 0.05
        params.append((w, b))
    return params


def _reference_forward(x, params):
    h = x
    for i, (w, b) in enumerate(params):
        h = h @ w + b
        if i < len(params) - 1:
            h = jnp.maximum(h, 0.0)
    return h


if __name__ == "__main__":
    key = jax.random.PRNGKey(0)
    key, kx = jax.random.split(key)

    # Ragged batch on purpose: exercises wrapper-side padding, the batch-block
    # clamp (2048 -> 256 here) and a 2-step "parallel" grid.
    batch = 300
    x = jax.random.normal(kx, (batch, IN_FEATURES), dtype=jnp.float32)
    params = init_params(key)

    packed = pack_params(params)                       # pack once, reuse
    fwd = jax.jit(static_surrogate_forward, static_argnames=("batch_block",))

    out = fwd(x, packed, batch_block=2048)
    out = jax.block_until_ready(out)

    ref = _reference_forward(x, params)
    assert out.shape == (batch, OUT_FEATURES)
    max_err = float(jnp.max(jnp.abs(out - ref)))
    # bf16 matmul operands (f32 accumulation) across 6 layers -> loose tolerance.
    assert jnp.allclose(out, ref, atol=1e-1, rtol=1e-1), (
        f"mismatch vs reference (max abs err {max_err:.4f})")

    print("KERNEL_OK")
</pallas_src>

<mosaic_0001>
module attributes {stable_mosaic.version = 11 : i64} {
  func.func @_mlp_kernel(%arg0: i32, %arg1: memref<8x256xbf16, #tpu.memory_space<vmem>>, %arg2: memref<64x8xbf16, #tpu.memory_space<vmem>>, %arg3: memref<64x1xf32, #tpu.memory_space<vmem>>, %arg4: memref<128x64xbf16, #tpu.memory_space<vmem>>, %arg5: memref<128x1xf32, #tpu.memory_space<vmem>>, %arg6: memref<128x128xbf16, #tpu.memory_space<vmem>>, %arg7: memref<128x1xf32, #tpu.memory_space<vmem>>, %arg8: memref<64x128xbf16, #tpu.memory_space<vmem>>, %arg9: memref<64x1xf32, #tpu.memory_space<vmem>>, %arg10: memref<32x64xbf16, #tpu.memory_space<vmem>>, %arg11: memref<32x1xf32, #tpu.memory_space<vmem>>, %arg12: memref<8x32xbf16, #tpu.memory_space<vmem>>, %arg13: memref<8x1xf32, #tpu.memory_space<vmem>>, %arg14: memref<1x1x256xf32, #tpu.memory_space<vmem>>) attributes {dimension_semantics = [#tpu.dimension_semantics<parallel>], iteration_bounds = array<i64: 2>, scalar_prefetch = 0 : i64, scratch_operands = 0 : i64, tpu.core_type = #tpu.core_type<tc>, window_params = [{transform_indices = @transform_0, window_bounds = array<i64: 8, 256>}, {pipeline_mode = #tpu.pipeline_mode<synchronous>, transform_indices = @transform_1, window_bounds = array<i64: 64, 8>}, {pipeline_mode = #tpu.pipeline_mode<synchronous>, transform_indices = @transform_2, window_bounds = array<i64: 64, 1>}, {pipeline_mode = #tpu.pipeline_mode<synchronous>, transform_indices = @transform_3, window_bounds = array<i64: 128, 64>}, {pipeline_mode = #tpu.pipeline_mode<synchronous>, transform_indices = @transform_4, window_bounds = array<i64: 128, 1>}, {pipeline_mode = #tpu.pipeline_mode<synchronous>, transform_indices = @transform_5, window_bounds = array<i64: 128, 128>}, {pipeline_mode = #tpu.pipeline_mode<synchronous>, transform_indices = @transform_6, window_bounds = array<i64: 128, 1>}, {pipeline_mode = #tpu.pipeline_mode<synchronous>, transform_indices = @transform_7, window_bounds = array<i64: 64, 128>}, {pipeline_mode = #tpu.pipeline_mode<synchronous>, transform_indices = @transform_8, window_bounds = array<i64: 64, 1>}, {pipeline_mode = #tpu.pipeline_mode<synchronous>, transform_indices = @transform_9, window_bounds = array<i64: 32, 64>}, {pipeline_mode = #tpu.pipeline_mode<synchronous>, transform_indices = @transform_10, window_bounds = array<i64: 32, 1>}, {pipeline_mode = #tpu.pipeline_mode<synchronous>, transform_indices = @transform_11, window_bounds = array<i64: 8, 32>}, {pipeline_mode = #tpu.pipeline_mode<synchronous>, transform_indices = @transform_12, window_bounds = array<i64: 8, 1>}, {transform_indices = @transform_13, window_bounds = array<i64: 1, 1, 256>}]} {
    %c0 = arith.constant 0 : index
    %c0_0 = arith.constant 0 : index
    %0 = vector.load %arg1[%c0, %c0_0] : memref<8x256xbf16, #tpu.memory_space<vmem>>, vector<8x256xbf16>
    %c0_1 = arith.constant 0 : index
    %c0_2 = arith.constant 0 : index
    %1 = vector.load %arg2[%c0_1, %c0_2] : memref<64x8xbf16, #tpu.memory_space<vmem>>, vector<64x8xbf16>
    %c0_3 = arith.constant 0 : index
    %c0_4 = arith.constant 0 : index
    %2 = vector.load %arg3[%c0_3, %c0_4] : memref<64x1xf32, #tpu.memory_space<vmem>>, vector<64x1xf32>
    %cst = arith.constant dense<0.000000e+00> : vector<64x256xf32>
    %3 = tpu.matmul %1, %0, %cst {dimension_numbers = #tpu.dot_dimension_numbers<[1], [0], [0], [1], [0, 0, 1, 1], [], []>} : vector<64x8xbf16>, vector<8x256xbf16>, vector<64x256xf32> -> vector<64x256xf32>
    %4 = vector.broadcast %2 : vector<64x1xf32> to vector<64x256xf32>
    %5 = arith.addf %3, %4 : vector<64x256xf32>
    %cst_5 = arith.constant 0.000000e+00 : f32
    %6 = vector.broadcast %cst_5 : f32 to vector<64x256xf32>
    %7 = arith.maximumf %5, %6 : vector<64x256xf32>
    %8 = arith.truncf %7 : vector<64x256xf32> to vector<64x256xbf16>
    %c0_6 = arith.constant 0 : index
    %c0_7 = arith.constant 0 : index
    %9 = vector.load %arg4[%c0_6, %c0_7] : memref<128x64xbf16, #tpu.memory_space<vmem>>, vector<128x64xbf16>
    %c0_8 = arith.constant 0 : index
    %c0_9 = arith.constant 0 : index
    %10 = vector.load %arg5[%c0_8, %c0_9] : memref<128x1xf32, #tpu.memory_space<vmem>>, vector<128x1xf32>
    %cst_10 = arith.constant dense<0.000000e+00> : vector<128x256xf32>
    %11 = tpu.matmul %9, %8, %cst_10 {dimension_numbers = #tpu.dot_dimension_numbers<[1], [0], [0], [1], [0, 0, 1, 1], [], []>} : vector<128x64xbf16>, vector<64x256xbf16>, vector<128x256xf32> -> vector<128x256xf32>
    %12 = vector.broadcast %10 : vector<128x1xf32> to vector<128x256xf32>
    %13 = arith.addf %11, %12 : vector<128x256xf32>
    %cst_11 = arith.constant 0.000000e+00 : f32
    %14 = vector.broadcast %cst_11 : f32 to vector<128x256xf32>
    %15 = arith.maximumf %13, %14 : vector<128x256xf32>
    %16 = arith.truncf %15 : vector<128x256xf32> to vector<128x256xbf16>
    %c0_12 = arith.constant 0 : index
    %c0_13 = arith.constant 0 : index
    %17 = vector.load %arg6[%c0_12, %c0_13] : memref<128x128xbf16, #tpu.memory_space<vmem>>, vector<128x128xbf16>
    %c0_14 = arith.constant 0 : index
    %c0_15 = arith.constant 0 : index
    %18 = vector.load %arg7[%c0_14, %c0_15] : memref<128x1xf32, #tpu.memory_space<vmem>>, vector<128x1xf32>
    %cst_16 = arith.constant dense<0.000000e+00> : vector<128x256xf32>
    %19 = tpu.matmul %17, %16, %cst_16 {dimension_numbers = #tpu.dot_dimension_numbers<[1], [0], [0], [1], [0, 0, 1, 1], [], []>} : vector<128x128xbf16>, vector<128x256xbf16>, vector<128x256xf32> -> vector<128x256xf32>
    %20 = vector.broadcast %18 : vector<128x1xf32> to vector<128x256xf32>
    %21 = arith.addf %19, %20 : vector<128x256xf32>
    %cst_17 = arith.constant 0.000000e+00 : f32
    %22 = vector.broadcast %cst_17 : f32 to vector<128x256xf32>
    %23 = arith.maximumf %21, %22 : vector<128x256xf32>
    %24 = arith.truncf %23 : vector<128x256xf32> to vector<128x256xbf16>
    %c0_18 = arith.constant 0 : index
    %c0_19 = arith.constant 0 : index
    %25 = vector.load %arg8[%c0_18, %c0_19] : memref<64x128xbf16, #tpu.memory_space<vmem>>, vector<64x128xbf16>
    %c0_20 = arith.constant 0 : index
    %c0_21 = arith.constant 0 : index
    %26 = vector.load %arg9[%c0_20, %c0_21] : memref<64x1xf32, #tpu.memory_space<vmem>>, vector<64x1xf32>
    %cst_22 = arith.constant dense<0.000000e+00> : vector<64x256xf32>
    %27 = tpu.matmul %25, %24, %cst_22 {dimension_numbers = #tpu.dot_dimension_numbers<[1], [0], [0], [1], [0, 0, 1, 1], [], []>} : vector<64x128xbf16>, vector<128x256xbf16>, vector<64x256xf32> -> vector<64x256xf32>
    %28 = vector.broadcast %26 : vector<64x1xf32> to vector<64x256xf32>
    %29 = arith.addf %27, %28 : vector<64x256xf32>
    %cst_23 = arith.constant 0.000000e+00 : f32
    %30 = vector.broadcast %cst_23 : f32 to vector<64x256xf32>
    %31 = arith.maximumf %29, %30 : vector<64x256xf32>
    %32 = arith.truncf %31 : vector<64x256xf32> to vector<64x256xbf16>
    %c0_24 = arith.constant 0 : index
    %c0_25 = arith.constant 0 : index
    %33 = vector.load %arg10[%c0_24, %c0_25] : memref<32x64xbf16, #tpu.memory_space<vmem>>, vector<32x64xbf16>
    %c0_26 = arith.constant 0 : index
    %c0_27 = arith.constant 0 : index
    %34 = vector.load %arg11[%c0_26, %c0_27] : memref<32x1xf32, #tpu.memory_space<vmem>>, vector<32x1xf32>
    %cst_28 = arith.constant dense<0.000000e+00> : vector<32x256xf32>
    %35 = tpu.matmul %33, %32, %cst_28 {dimension_numbers = #tpu.dot_dimension_numbers<[1], [0], [0], [1], [0, 0, 1, 1], [], []>} : vector<32x64xbf16>, vector<64x256xbf16>, vector<32x256xf32> -> vector<32x256xf32>
    %36 = vector.broadcast %34 : vector<32x1xf32> to vector<32x256xf32>
    %37 = arith.addf %35, %36 : vector<32x256xf32>
    %cst_29 = arith.constant 0.000000e+00 : f32
    %38 = vector.broadcast %cst_29 : f32 to vector<32x256xf32>
    %39 = arith.maximumf %37, %38 : vector<32x256xf32>
    %40 = arith.truncf %39 : vector<32x256xf32> to vector<32x256xbf16>
    %c0_30 = arith.constant 0 : index
    %c0_31 = arith.constant 0 : index
    %41 = vector.load %arg12[%c0_30, %c0_31] : memref<8x32xbf16, #tpu.memory_space<vmem>>, vector<8x32xbf16>
    %c0_32 = arith.constant 0 : index
    %c0_33 = arith.constant 0 : index
    %42 = vector.load %arg13[%c0_32, %c0_33] : memref<8x1xf32, #tpu.memory_space<vmem>>, vector<8x1xf32>
    %cst_34 = arith.constant dense<0.000000e+00> : vector<8x256xf32>
    %43 = tpu.matmul %41, %40, %cst_34 {dimension_numbers = #tpu.dot_dimension_numbers<[1], [0], [0], [1], [0, 0, 1, 1], [], []>} : vector<8x32xbf16>, vector<32x256xbf16>, vector<8x256xf32> -> vector<8x256xf32>
    %44 = vector.broadcast %42 : vector<8x1xf32> to vector<8x256xf32>
    %45 = arith.addf %43, %44 : vector<8x256xf32>
    %46 = vector.extract_strided_slice %45 {offsets = [0, 0], sizes = [1, 256], strides = [1, 1]} : vector<8x256xf32> to vector<1x256xf32>
    %c0_35 = arith.constant 0 : index
    %c0_36 = arith.constant 0 : index
    %c0_37 = arith.constant 0 : index
    %47 = vector.load %arg14[%c0_35, %c0_36, %c0_37] : memref<1x1x256xf32, #tpu.memory_space<vmem>>, vector<1x1x256xf32>
    %48 = vector.shape_cast %47 : vector<1x1x256xf32> to vector<1x256xf32>
    %49 = vector.shape_cast %46 : vector<1x256xf32> to vector<1x1x256xf32>
    tpu.vector_store %arg14[%c0_35, %c0_36, %c0_37], %49 {strides = array<i32>} : memref<1x1x256xf32, #tpu.memory_space<vmem>>, vector<1x1x256xf32>,
    return
  }
  func.func @transform_0(%arg0: i32) -> (i32, i32) {
    %c0_i32 = arith.constant 0 : i32
    %c0_i32_0 = arith.constant 0 : i32
    return %c0_i32, %arg0 : i32, i32
  }
  func.func @transform_1(%arg0: i32) -> (i32, i32) {
    %c0_i32 = arith.constant 0 : i32
    %c0_i32_0 = arith.constant 0 : i32
    %c0_i32_1 = arith.constant 0 : i32
    return %c0_i32, %c0_i32_0 : i32, i32
  }
  func.func @transform_2(%arg0: i32) -> (i32, i32) {
    %c0_i32 = arith.constant 0 : i32
    %c0_i32_0 = arith.constant 0 : i32
    %c0_i32_1 = arith.constant 0 : i32
    return %c0_i32, %c0_i32_0 : i32, i32
  }
  func.func @transform_3(%arg0: i32) -> (i32, i32) {
    %c0_i32 = arith.constant 0 : i32
    %c0_i32_0 = arith.constant 0 : i32
    %c0_i32_1 = arith.constant 0 : i32
    return %c0_i32, %c0_i32_0 : i32, i32
  }
  func.func @transform_4(%arg0: i32) -> (i32, i32) {
    %c0_i32 = arith.constant 0 : i32
    %c0_i32_0 = arith.constant 0 : i32
    %c0_i32_1 = arith.constant 0 : i32
    return %c0_i32, %c0_i32_0 : i32, i32
  }
  func.func @transform_5(%arg0: i32) -> (i32, i32) {
    %c0_i32 = arith.constant 0 : i32
    %c0_i32_0 = arith.constant 0 : i32
    %c0_i32_1 = arith.constant 0 : i32
    return %c0_i32, %c0_i32_0 : i32, i32
  }
  func.func @transform_6(%arg0: i32) -> (i32, i32) {
    %c0_i32 = arith.constant 0 : i32
    %c0_i32_0 = arith.constant 0 : i32
    %c0_i32_1 = arith.constant 0 : i32
    return %c0_i32, %c0_i32_0 : i32, i32
  }
  func.func @transform_7(%arg0: i32) -> (i32, i32) {
    %c0_i32 = arith.constant 0 : i32
    %c0_i32_0 = arith.constant 0 : i32
    %c0_i32_1 = arith.constant 0 : i32
    return %c0_i32, %c0_i32_0 : i32, i32
  }
  func.func @transform_8(%arg0: i32) -> (i32, i32) {
    %c0_i32 = arith.constant 0 : i32
    %c0_i32_0 = arith.constant 0 : i32
    %c0_i32_1 = arith.constant 0 : i32
    return %c0_i32, %c0_i32_0 : i32, i32
  }
  func.func @transform_9(%arg0: i32) -> (i32, i32) {
    %c0_i32 = arith.constant 0 : i32
    %c0_i32_0 = arith.constant 0 : i32
    %c0_i32_1 = arith.constant 0 : i32
    return %c0_i32, %c0_i32_0 : i32, i32
  }
  func.func @transform_10(%arg0: i32) -> (i32, i32) {
    %c0_i32 = arith.constant 0 : i32
    %c0_i32_0 = arith.constant 0 : i32
    %c0_i32_1 = arith.constant 0 : i32
    return %c0_i32, %c0_i32_0 : i32, i32
  }
  func.func @transform_11(%arg0: i32) -> (i32, i32) {
    %c0_i32 = arith.constant 0 : i32
    %c0_i32_0 = arith.constant 0 : i32
    %c0_i32_1 = arith.constant 0 : i32
    return %c0_i32, %c0_i32_0 : i32, i32
  }
  func.func @transform_12(%arg0: i32) -> (i32, i32) {
    %c0_i32 = arith.constant 0 : i32
    %c0_i32_0 = arith.constant 0 : i32
    %c0_i32_1 = arith.constant 0 : i32
    return %c0_i32, %c0_i32_0 : i32, i32
  }
  func.func @transform_13(%arg0: i32) -> (i32, i32, i32) {
    %c0_i32 = arith.constant 0 : i32
    %c0_i32_0 = arith.constant 0 : i32
    %c0_i32_1 = arith.constant 0 : i32
    return %arg0, %c0_i32, %c0_i32_0 : i32, i32, i32
  }
}

</mosaic_0001>

<llo_original>
// kernel: static_surrogate_forward.1
$region0: #{static_surrogate_forward.1}
  #allocation0 [shape = 'u32[]', space=smem, size = 0x4, offset = 0x4, fixed_abs, tag = 'smem constant byte address 0x4 - core index']
  #allocation1 [shape = 'u32[144,128]{1,0:T(1,128)}', space=vmem, size = 0x12000, scoped, tag = 'internal scratch']
  %s0 = inlined_call_operand.vmem [shape: bf16[8,512], index: 0, kind: input, shape index: {}]
  %s1 = inlined_call_operand.vmem [shape: bf16[64,8], index: 1, kind: input, shape index: {}]
  %s2 = inlined_call_operand.vmem [shape: f32[64,1], index: 2, kind: input, shape index: {}]
  %s3 = inlined_call_operand.vmem [shape: bf16[128,64], index: 3, kind: input, shape index: {}]
  %s4 = inlined_call_operand.vmem [shape: f32[128,1], index: 4, kind: input, shape index: {}]
  %s5 = inlined_call_operand.vmem [shape: bf16[128,128], index: 5, kind: input, shape index: {}]
  %s6 = inlined_call_operand.vmem [shape: f32[128,1], index: 6, kind: input, shape index: {}]
  %s7 = inlined_call_operand.vmem [shape: bf16[64,128], index: 7, kind: input, shape index: {}]
  %s8 = inlined_call_operand.vmem [shape: f32[64,1], index: 8, kind: input, shape index: {}]
  %s9 = inlined_call_operand.vmem [shape: bf16[32,64], index: 9, kind: input, shape index: {}]
  %s10 = inlined_call_operand.vmem [shape: f32[32,1], index: 10, kind: input, shape index: {}]
  %s11 = inlined_call_operand.vmem [shape: bf16[8,32], index: 11, kind: input, shape index: {}]
  %s12 = inlined_call_operand.vmem [shape: f32[8,1], index: 12, kind: input, shape index: {}]
  %s13 = inlined_call_operand.vmem [shape: f32[2,1,256], index: 13, kind: output, shape index: {}]
  %s14 = sld [smem:[#allocation0]]
  $region85: #{static_surrogate_forward.1} parent=0
    _
  %s16 = ssub.s32 1, %s14
  %s17 = scalar_select 0, %s16, %s14
  loop: start=0, step=1, limit=4
  $region2: #{static_surrogate_forward.1} parent=0 // loop_pre_header
    _
  $region3: #{static_surrogate_forward.1} parent=0 // loop_header
    %s19 = sphi 0, %s23
    %p20 = scmp.ge.s32.totalorder %s19, 4
    %s29 = sphi 0, %s31
    %s32 = sphi 0, %s29
    %s33 = sphi 0, %s32
    %s49 = sphi 0, %s33
    %s53 = sphi 0, %s53
    %s55 = sphi 0, %s53
    %s56 = sphi 0, %s55
    %s70 = sphi 0, %s56
    %s74 = sphi 0, %s74
    %s76 = sphi 0, %s74
    %s77 = sphi 0, %s76
    %s91 = sphi 0, %s77
    %s95 = sphi 0, %s95
    %s97 = sphi 0, %s95
    %s98 = sphi 0, %s97
    %s112 = sphi 0, %s98
    %s116 = sphi 0, %s116
    %s118 = sphi 0, %s116
    %s119 = sphi 0, %s118
    %s133 = sphi 0, %s119
    %s137 = sphi 0, %s137
    %s139 = sphi 0, %s137
    %s140 = sphi 0, %s139
    %s154 = sphi 0, %s140
    %s158 = sphi 0, %s158
    %s160 = sphi 0, %s158
    %s161 = sphi 0, %s160
    %s175 = sphi 0, %s161
    %s179 = sphi 0, %s179
    %s181 = sphi 0, %s179
    %s182 = sphi 0, %s181
    %s196 = sphi 0, %s182
    %s200 = sphi 0, %s200
    %s202 = sphi 0, %s200
    %s203 = sphi 0, %s202
    %s217 = sphi 0, %s203
    %s221 = sphi 0, %s221
    %s223 = sphi 0, %s221
    %s224 = sphi 0, %s223
    %s238 = sphi 0, %s224
    %s242 = sphi 0, %s242
    %s244 = sphi 0, %s242
    %s245 = sphi 0, %s244
    %s259 = sphi 0, %s245
    %s263 = sphi 0, %s263
    %s265 = sphi 0, %s263
    %s266 = sphi 0, %s265
    %s280 = sphi 0, %s266
    %s284 = sphi 0, %s284
    %s286 = sphi 0, %s284
    %s287 = sphi 0, %s286
    %s301 = sphi 0, %s287
    %s307 = sphi 0, %s309
    %s310 = sphi 0, %s307
    %s311 = sphi 0, %s310
    %s327 = sphi 0, %s311
  $region4: #{static_surrogate_forward.1} parent=0 // loop_header_branch
    %22 = sbr.rel (%p20) target = $region8
  $region5: #{static_surrogate_forward.1} parent=0 // loop_body
    %s24 = ssub.s32 %s19, 1
    %s25 = ssub.s32 %s19, 2
    %s26 = sadd.s32 %s19, 1
    %s27 = ssub.s32 %s19, %s26
    %p28 = scmp.eq.s32.totalorder %s27, 0
    %s30 = sadd.s32 %s29, 1
    %s31 = scalar_select %p28, %s29, %s30
    %p34 = pneg %p28
    %p35 = scmp.eq.s32.totalorder %s19, 1
    %p36 = por %p34, %p35
    %p37 = scmp.ne.s32.totalorder %s29, %s32
    %p38 = scmp.eq.s32.totalorder %s19, 0
    %p39 = por %p37, %p38
    %p40 = scmp.ne.s32.totalorder %s29, %s32
    %p41 = scmp.eq.s32.totalorder %s24, 1
    %p42 = por %p40, %p41
    %p43 = scmp.ne.s32.totalorder %s32, %s33
    %p44 = scmp.eq.s32.totalorder %s24, 0
    %p45 = por %p43, %p44
    %p46 = scmp.ne.s32.totalorder %s32, %s33
    %p47 = scmp.eq.s32.totalorder %s25, 1
    %p48 = por %p46, %p47
    %p50 = scmp.ne.s32.totalorder %s33, %s49
    %p51 = scmp.eq.s32.totalorder %s25, 0
    %p52 = por %p50, %p51
    %s54 = sadd.s32 %s53, 1
    %p57 = scmp.eq.s32.totalorder %s19, 1
    %p58 = scmp.ne.s32.totalorder %s53, %s55
    %p59 = scmp.eq.s32.totalorder %s19, 0
    %p60 = por %p58, %p59
    %p61 = scmp.ne.s32.totalorder %s53, %s55
    %p62 = scmp.eq.s32.totalorder %s24, 1
    %p63 = por %p61, %p62
    %p64 = scmp.ne.s32.totalorder %s55, %s56
    %p65 = scmp.eq.s32.totalorder %s24, 0
    %p66 = por %p64, %p65
    %p67 = scmp.ne.s32.totalorder %s55, %s56
    %p68 = scmp.eq.s32.totalorder %s25, 1
    %p69 = por %p67, %p68
    %p71 = scmp.ne.s32.totalorder %s56, %s70
    %p72 = scmp.eq.s32.totalorder %s25, 0
    %p73 = por %p71, %p72
    %s75 = sadd.s32 %s74, 1
    %p78 = scmp.eq.s32.totalorder %s19, 1
    %p79 = scmp.ne.s32.totalorder %s74, %s76
    %p80 = scmp.eq.s32.totalorder %s19, 0
    %p81 = por %p79, %p80
    %p82 = scmp.ne.s32.totalorder %s74, %s76
    %p83 = scmp.eq.s32.totalorder %s24, 1
    %p84 = por %p82, %p83
    %p85 = scmp.ne.s32.totalorder %s76, %s77
    %p86 = scmp.eq.s32.totalorder %s24, 0
    %p87 = por %p85, %p86
    %p88 = scmp.ne.s32.totalorder %s76, %s77
    %p89 = scmp.eq.s32.totalorder %s25, 1
    %p90 = por %p88, %p89
    %p92 = scmp.ne.s32.totalorder %s77, %s91
    %p93 = scmp.eq.s32.totalorder %s25, 0
    %p94 = por %p92, %p93
    %s96 = sadd.s32 %s95, 1
    %p99 = scmp.eq.s32.totalorder %s19, 1
    %p100 = scmp.ne.s32.totalorder %s95, %s97
    %p101 = scmp.eq.s32.totalorder %s19, 0
    %p102 = por %p100, %p101
    %p103 = scmp.ne.s32.totalorder %s95, %s97
    %p104 = scmp.eq.s32.totalorder %s24, 1
    %p105 = por %p103, %p104
    %p106 = scmp.ne.s32.totalorder %s97, %s98
    %p107 = scmp.eq.s32.totalorder %s24, 0
    %p108 = por %p106, %p107
    %p109 = scmp.ne.s32.totalorder %s97, %s98
    %p110 = scmp.eq.s32.totalorder %s25, 1
    %p111 = por %p109, %p110
    %p113 = scmp.ne.s32.totalorder %s98, %s112
    %p114 = scmp.eq.s32.totalorder %s25, 0
    %p115 = por %p113, %p114
    %s117 = sadd.s32 %s116, 1
    %p120 = scmp.eq.s32.totalorder %s19, 1
    %p121 = scmp.ne.s32.totalorder %s116, %s118
    %p122 = scmp.eq.s32.totalorder %s19, 0
    %p123 = por %p121, %p122
    %p124 = scmp.ne.s32.totalorder %s116, %s118
    %p125 = scmp.eq.s32.totalorder %s24, 1
    %p126 = por %p124, %p125
    %p127 = scmp.ne.s32.totalorder %s118, %s119
    %p128 = scmp.eq.s32.totalorder %s24, 0
    %p129 = por %p127, %p128
    %p130 = scmp.ne.s32.totalorder %s118, %s119
    %p131 = scmp.eq.s32.totalorder %s25, 1
    %p132 = por %p130, %p131
    %p134 = scmp.ne.s32.totalorder %s119, %s133
    %p135 = scmp.eq.s32.totalorder %s25, 0
    %p136 = por %p134, %p135
    %s138 = sadd.s32 %s137, 1
    %p141 = scmp.eq.s32.totalorder %s19, 1
    %p142 = scmp.ne.s32.totalorder %s137, %s139
    %p143 = scmp.eq.s32.totalorder %s19, 0
    %p144 = por %p142, %p143
    %p145 = scmp.ne.s32.totalorder %s137, %s139
    %p146 = scmp.eq.s32.totalorder %s24, 1
    %p147 = por %p145, %p146
    %p148 = scmp.ne.s32.totalorder %s139, %s140
    %p149 = scmp.eq.s32.totalorder %s24, 0
    %p150 = por %p148, %p149
    %p151 = scmp.ne.s32.totalorder %s139, %s140
    %p152 = scmp.eq.s32.totalorder %s25, 1
    %p153 = por %p151, %p152
    %p155 = scmp.ne.s32.totalorder %s140, %s154
    %p156 = scmp.eq.s32.totalorder %s25, 0
    %p157 = por %p155, %p156
    %s159 = sadd.s32 %s158, 1
    %p162 = scmp.eq.s32.totalorder %s19, 1
    %p163 = scmp.ne.s32.totalorder %s158, %s160
    %p164 = scmp.eq.s32.totalorder %s19, 0
    %p165 = por %p163, %p164
    %p166 = scmp.ne.s32.totalorder %s158, %s160
    %p167 = scmp.eq.s32.totalorder %s24, 1
    %p168 = por %p166, %p167
    %p169 = scmp.ne.s32.totalorder %s160, %s161
    %p170 = scmp.eq.s32.totalorder %s24, 0
    %p171 = por %p169, %p170
    %p172 = scmp.ne.s32.totalorder %s160, %s161
    %p173 = scmp.eq.s32.totalorder %s25, 1
    %p174 = por %p172, %p173
    %p176 = scmp.ne.s32.totalorder %s161, %s175
    %p177 = scmp.eq.s32.totalorder %s25, 0
    %p178 = por %p176, %p177
    %s180 = sadd.s32 %s179, 1
    %p183 = scmp.eq.s32.totalorder %s19, 1
    %p184 = scmp.ne.s32.totalorder %s179, %s181
    %p185 = scmp.eq.s32.totalorder %s19, 0
    %p186 = por %p184, %p185
    %p187 = scmp.ne.s32.totalorder %s179, %s181
    %p188 = scmp.eq.s32.totalorder %s24, 1
    %p189 = por %p187, %p188
    %p190 = scmp.ne.s32.totalorder %s181, %s182
    %p191 = scmp.eq.s32.totalorder %s24, 0
    %p192 = por %p190, %p191
    %p193 = scmp.ne.s32.totalorder %s181, %s182
    %p194 = scmp.eq.s32.totalorder %s25, 1
    %p195 = por %p193, %p194
    %p197 = scmp.ne.s32.totalorder %s182, %s196
    %p198 = scmp.eq.s32.totalorder %s25, 0
    %p199 = por %p197, %p198
    %s201 = sadd.s32 %s200, 1
    %p204 = scmp.eq.s32.totalorder %s19, 1
    %p205 = scmp.ne.s32.totalorder %s200, %s202
    %p206 = scmp.eq.s32.totalorder %s19, 0
    %p207 = por %p205, %p206
    %p208 = scmp.ne.s32.totalorder %s200, %s202
    %p209 = scmp.eq.s32.totalorder %s24, 1
    %p210 = por %p208, %p209
    %p211 = scmp.ne.s32.totalorder %s202, %s203
    %p212 = scmp.eq.s32.totalorder %s24, 0
    %p213 = por %p211, %p212
    %p214 = scmp.ne.s32.totalorder %s202, %s203
    %p215 = scmp.eq.s32.totalorder %s25, 1
    %p216 = por %p214, %p215
    %p218 = scmp.ne.s32.totalorder %s203, %s217
    %p219 = scmp.eq.s32.totalorder %s25, 0
    %p220 = por %p218, %p219
    %s222 = sadd.s32 %s221, 1
    %p225 = scmp.eq.s32.totalorder %s19, 1
    %p226 = scmp.ne.s32.totalorder %s221, %s223
    %p227 = scmp.eq.s32.totalorder %s19, 0
    %p228 = por %p226, %p227
    %p229 = scmp.ne.s32.totalorder %s221, %s223
    %p230 = scmp.eq.s32.totalorder %s24, 1
    %p231 = por %p229, %p230
    %p232 = scmp.ne.s32.totalorder %s223, %s224
    %p233 = scmp.eq.s32.totalorder %s24, 0
    %p234 = por %p232, %p233
    %p235 = scmp.ne.s32.totalorder %s223, %s224
    %p236 = scmp.eq.s32.totalorder %s25, 1
    %p237 = por %p235, %p236
    %p239 = scmp.ne.s32.totalorder %s224, %s238
    %p240 = scmp.eq.s32.totalorder %s25, 0
    %p241 = por %p239, %p240
    %s243 = sadd.s32 %s242, 1
    %p246 = scmp.eq.s32.totalorder %s19, 1
    %p247 = scmp.ne.s32.totalorder %s242, %s244
    %p248 = scmp.eq.s32.totalorder %s19, 0
    %p249 = por %p247, %p248
    %p250 = scmp.ne.s32.totalorder %s242, %s244
    %p251 = scmp.eq.s32.totalorder %s24, 1
    %p252 = por %p250, %p251
    %p253 = scmp.ne.s32.totalorder %s244, %s245
    %p254 = scmp.eq.s32.totalorder %s24, 0
    %p255 = por %p253, %p254
    %p256 = scmp.ne.s32.totalorder %s244, %s245
    %p257 = scmp.eq.s32.totalorder %s25, 1
    %p258 = por %p256, %p257
    %p260 = scmp.ne.s32.totalorder %s245, %s259
    %p261 = scmp.eq.s32.totalorder %s25, 0
    %p262 = por %p260, %p261
    %s264 = sadd.s32 %s263, 1
    %p267 = scmp.eq.s32.totalorder %s19, 1
    %p268 = scmp.ne.s32.totalorder %s263, %s265
    %p269 = scmp.eq.s32.totalorder %s19, 0
    %p270 = por %p268, %p269
    %p271 = scmp.ne.s32.totalorder %s263, %s265
    %p272 = scmp.eq.s32.totalorder %s24, 1
    %p273 = por %p271, %p272
    %p274 = scmp.ne.s32.totalorder %s265, %s266
    %p275 = scmp.eq.s32.totalorder %s24, 0
    %p276 = por %p274, %p275
    %p277 = scmp.ne.s32.totalorder %s265, %s266
    %p278 = scmp.eq.s32.totalorder %s25, 1
    %p279 = por %p277, %p278
    %p281 = scmp.ne.s32.totalorder %s266, %s280
    %p282 = scmp.eq.s32.totalorder %s25, 0
    %p283 = por %p281, %p282
    %s285 = sadd.s32 %s284, 1
    %p288 = scmp.eq.s32.totalorder %s19, 1
    %p289 = scmp.ne.s32.totalorder %s284, %s286
    %p290 = scmp.eq.s32.totalorder %s19, 0
    %p291 = por %p289, %p290
    %p292 = scmp.ne.s32.totalorder %s284, %s286
    %p293 = scmp.eq.s32.totalorder %s24, 1
    %p294 = por %p292, %p293
    %p295 = scmp.ne.s32.totalorder %s286, %s287
    %p296 = scmp.eq.s32.totalorder %s24, 0
    %p297 = por %p295, %p296
    %p298 = scmp.ne.s32.totalorder %s286, %s287
    %p299 = scmp.eq.s32.totalorder %s25, 1
    %p300 = por %p298, %p299
    %p302 = scmp.ne.s32.totalorder %s287, %s301
    %p303 = scmp.eq.s32.totalorder %s25, 0
    %p304 = por %p302, %p303
    %s305 = ssub.s32 %s19, %s26
    %p306 = scmp.eq.s32.totalorder %s305, 0
    %s308 = sadd.s32 %s307, 1
    %s309 = scalar_select %p306, %s307, %s308
    %p312 = pneg %p306
    %p313 = scmp.eq.s32.totalorder %s19, 1
    %p314 = por %p312, %p313
    %p315 = scmp.ne.s32.totalorder %s307, %s310
    %p316 = scmp.eq.s32.totalorder %s19, 0
    %p317 = por %p315, %p316
    %p318 = scmp.ne.s32.totalorder %s307, %s310
    %p319 = scmp.eq.s32.totalorder %s24, 1
    %p320 = por %p318, %p319
    %p321 = scmp.ne.s32.totalorder %s310, %s311
    %p322 = scmp.eq.s32.totalorder %s24, 0
    %p323 = por %p321, %p322
    %p324 = scmp.ne.s32.totalorder %s310, %s311
    %p325 = scmp.eq.s32.totalorder %s25, 1
    %p326 = por %p324, %p325
    %p328 = scmp.ne.s32.totalorder %s311, %s327
    %p329 = scmp.eq.s32.totalorder %s25, 0
    %p330 = por %p328, %p329
    %p331 = scmp.le.s32.totalorder 1, %s19
    %p332 = scmp.lt.s32.totalorder %s19, 3
    %p333 = pnand %p331, %p332
    %p334 = pneg %p333
    // Predicated region
    $region9: #{static_surrogate_forward.1} parent=5 // pred_check
      _
    $region10: #{static_surrogate_forward.1} parent=5 // pred_check_branch
      %336 = sbr.rel (%p333) target = $region12
    $region11: #{static_surrogate_forward.1} parent=5 // pred_region
      %s337 = ssub.s32 %s19, 1
      // Predicated region
      $region13: #{static_surrogate_forward.1} parent=11 // pred_check
        %p338 = pneg %p66
      $region14: #{static_surrogate_forward.1} parent=11 // pred_check_branch
        %340 = sbr.rel (%p338) target = $region16
      $region15: #{static_surrogate_forward.1} parent=11 // pred_region
        _
      $region16: #{static_surrogate_forward.1} parent=11 // pred_fallthru
        _
      // Predicated region
      $region17: #{static_surrogate_forward.1} parent=11 // pred_check
        %p341 = pneg %p87
      $region18: #{static_surrogate_forward.1} parent=11 // pred_check_branch
        %343 = sbr.rel (%p341) target = $region20
      $region19: #{static_surrogate_forward.1} parent=11 // pred_region
        _
      $region20: #{static_surrogate_forward.1} parent=11 // pred_fallthru
        _
      // Predicated region
      $region21: #{static_surrogate_forward.1} parent=11 // pred_check
        %p344 = pneg %p108
      $region22: #{static_surrogate_forward.1} parent=11 // pred_check_branch
        %346 = sbr.rel (%p344) target = $region24
      $region23: #{static_surrogate_forward.1} parent=11 // pred_region
        _
      $region24: #{static_surrogate_forward.1} parent=11 // pred_fallthru
        _
      // Predicated region
      $region25: #{static_surrogate_forward.1} parent=11 // pred_check
        %p347 = pneg %p129
      $region26: #{static_surrogate_forward.1} parent=11 // pred_check_branch
        %349 = sbr.rel (%p347) target = $region28
      $region27: #{static_surrogate_forward.1} parent=11 // pred_region
        _
      $region28: #{static_surrogate_forward.1} parent=11 // pred_fallthru
        _
      // Predicated region
      $region29: #{static_surrogate_forward.1} parent=11 // pred_check
        %p350 = pneg %p150
      $region30: #{static_surrogate_forward.1} parent=11 // pred_check_branch
        %352 = sbr.rel (%p350) target = $region32
      $region31: #{static_surrogate_forward.1} parent=11 // pred_region
        _
      $region32: #{static_surrogate_forward.1} parent=11 // pred_fallthru
        _
      // Predicated region
      $region33: #{static_surrogate_forward.1} parent=11 // pred_check
        %p353 = pneg %p171
      $region34: #{static_surrogate_forward.1} parent=11 // pred_check_branch
        %355 = sbr.rel (%p353) target = $region36
      $region35: #{static_surrogate_forward.1} parent=11 // pred_region
        _
      $region36: #{static_surrogate_forward.1} parent=11 // pred_fallthru
        _
      // Predicated region
      $region37: #{static_surrogate_forward.1} parent=11 // pred_check
        %p356 = pneg %p192
      $region38: #{static_surrogate_forward.1} parent=11 // pred_check_branch
        %358 = sbr.rel (%p356) target = $region40
      $region39: #{static_surrogate_forward.1} parent=11 // pred_region
        _
      $region40: #{static_surrogate_forward.1} parent=11 // pred_fallthru
        _
      // Predicated region
      $region41: #{static_surrogate_forward.1} parent=11 // pred_check
        %p359 = pneg %p213
      $region42: #{static_surrogate_forward.1} parent=11 // pred_check_branch
        %361 = sbr.rel (%p359) target = $region44
      $region43: #{static_surrogate_forward.1} parent=11 // pred_region
        _
      $region44: #{static_surrogate_forward.1} parent=11 // pred_fallthru
        _
      // Predicated region
      $region45: #{static_surrogate_forward.1} parent=11 // pred_check
        %p362 = pneg %p234
      $region46: #{static_surrogate_forward.1} parent=11 // pred_check_branch
        %364 = sbr.rel (%p362) target = $region48
      $region47: #{static_surrogate_forward.1} parent=11 // pred_region
        _
      $region48: #{static_surrogate_forward.1} parent=11 // pred_fallthru
        _
      // Predicated region
      $region49: #{static_surrogate_forward.1} parent=11 // pred_check
        %p365 = pneg %p255
      $region50: #{static_surrogate_forward.1} parent=11 // pred_check_branch
        %367 = sbr.rel (%p365) target = $region52
      $region51: #{static_surrogate_forward.1} parent=11 // pred_region
        _
      $region52: #{static_surrogate_forward.1} parent=11 // pred_fallthru
        _
      // Predicated region
      $region53: #{static_surrogate_forward.1} parent=11 // pred_check
        %p368 = pneg %p276
      $region54: #{static_surrogate_forward.1} parent=11 // pred_check_branch
        %370 = sbr.rel (%p368) target = $region56
      $region55: #{static_surrogate_forward.1} parent=11 // pred_region
        _
      $region56: #{static_surrogate_forward.1} parent=11 // pred_fallthru
        _
      // Predicated region
      $region57: #{static_surrogate_forward.1} parent=11 // pred_check
        %p371 = pneg %p297
      $region58: #{static_surrogate_forward.1} parent=11 // pred_check_branch
        %373 = sbr.rel (%p371) target = $region60
      $region59: #{static_surrogate_forward.1} parent=11 // pred_region
        _
      $region60: #{static_surrogate_forward.1} parent=11 // pred_fallthru
        _
    $region12: #{static_surrogate_forward.1} parent=5 // pred_fallthru
      _
    %p374 = scmp.lt.s32.totalorder %s19, 2
    // Predicated region
    $region61: #{static_surrogate_forward.1} parent=5 // pred_check
      %p375 = pneg %p374
    $region62: #{static_surrogate_forward.1} parent=5 // pred_check_branch
      %377 = sbr.rel (%p375) target = $region64
    $region63: #{static_surrogate_forward.1} parent=5 // pred_region
      // Predicated region
      $region65: #{static_surrogate_forward.1} parent=63 // pred_check
        %p378 = pneg %p39
      $region66: #{static_surrogate_forward.1} parent=63 // pred_check_branch
        %380 = sbr.rel (%p378) target = $region68
      $region67: #{static_surrogate_forward.1} parent=63 // pred_region
        %s381 = smul.u32 2, %s19
        %p382 = scmp.lt.s32.totalorder %s381, 3
        %s383 = scalar_select %p382, %s381, 3
        %s384 = smul.addr %s383, 4
        %s385 = scalar_lea.vmem %s0, %s384
        %s386 = smul.u32 2, %s19
      $region68: #{static_surrogate_forward.1} parent=63 // pred_fallthru
        _
    $region64: #{static_surrogate_forward.1} parent=5 // pred_fallthru
      _
    %p387 = scmp.le.s32.totalorder 1, %s19
    %p388 = scmp.lt.s32.totalorder %s19, 3
    %p389 = pnand %p387, %p388
    %p390 = pneg %p389
    // Predicated region
    $region69: #{static_surrogate_forward.1} parent=5 // pred_check
      _
    $region70: #{static_surrogate_forward.1} parent=5 // pred_check_branch
      %392 = sbr.rel (%p389) target = $region72
    $region71: #{static_surrogate_forward.1} parent=5 // pred_region
      %s393 = ssub.s32 %s19, 1
      %s394 = smul.u32 2, %s24
      %p395 = scmp.lt.s32.totalorder %s394, 3
      %s396 = scalar_select %p395, %s394, 3
      %s397 = smul.addr %s396, 4
      %s398 = scalar_lea.vmem %s0, %s397
      %p399 = pneg %p45
      %p400 = pneg %p42
      %p401 = pneg %p66
      %p402 = pneg %p63
      %p403 = pneg %p87
      %p404 = pneg %p84
      %p405 = pneg %p108
      %p406 = pneg %p105
      %p407 = pneg %p129
      %p408 = pneg %p126
      %p409 = pneg %p150
      %p410 = pneg %p147
      %p411 = pneg %p171
      %p412 = pneg %p168
      %p413 = pneg %p192
      %p414 = pneg %p189
      %p415 = pneg %p213
      %p416 = pneg %p210
      %p417 = pneg %p234
      %p418 = pneg %p231
      %p419 = pneg %p255
      %p420 = pneg %p252
      %p421 = pneg %p276
      %p422 = pneg %p273
      %p423 = pneg %p297
      %p424 = pneg %p294
      %p425 = pneg %p323
      %p426 = pneg %p320
      %p427 = scmp.lt.s32.totalorder %s24, 1
      %s428 = scalar_select %p427, %s24, 1
      %s429 = smul.addr %s428, 2
      %s430 = scalar_lea.vmem %s13, %s429
      %s431 = smul.u32 2, %s24
      %p432 = scmp.lt.s32.totalorder %s431, 3
      %s433 = scalar_select %p432, %s431, 3
      %s434 = smul.addr %s433, 4
      %s435 = scalar_lea.vmem %s0, %s434
      %s436 = smul.u32 2, %s24
      %p437 = scmp.lt.s32.totalorder %s24, 1
      %s438 = scalar_select %p437, %s24, 1
      %s439 = smul.addr %s438, 2
      %s440 = scalar_lea.vmem %s13, %s439
      %v442 = vld [vmem:[%s435] sm:$0xff]
      %v443 = vld [vmem:[%s1] sm:$0xf]
      %v444 = vld [vmem:[%s1 + $0x4] sm:$0xf]
      %v445 = vld [vmem:[%s1 + $0x8] sm:$0xf]
      %v446 = vld [vmem:[%s1 + $0xc] sm:$0xf]
      %v447 = vld [vmem:[%s1 + $0x10] sm:$0xf]
      %v448 = vld [vmem:[%s1 + $0x14] sm:$0xf]
      %v449 = vld [vmem:[%s1 + $0x18] sm:$0xf]
      %v450 = vld [vmem:[%s1 + $0x1c] sm:$0xf]
      %v451 = vld [vmem:[%s2] sm:$0xff]
      %v452 = vld [vmem:[%s2 + $0x8] sm:$0xff]
      %v453 = vld [vmem:[%s2 + $0x10] sm:$0xff]
      %v454 = vld [vmem:[%s2 + $0x18] sm:$0xff]
      %v455 = vld [vmem:[%s2 + $0x20] sm:$0xff]
      %v456 = vld [vmem:[%s2 + $0x28] sm:$0xff]
      %v457 = vld [vmem:[%s2 + $0x30] sm:$0xff]
      %v458 = vld [vmem:[%s2 + $0x38] sm:$0xff]
      %460 = vset.pattern.permute.xlu0 0
      %461 = vperm.xlu0 %460, %v451
      %v462 = vpop.permute.xlu0 %461
      %465 = vset.pattern.permute.xlu0 0
      %466 = vperm.xlu0 %465, %v452
      %v467 = vpop.permute.xlu0 %466
      %470 = vset.pattern.permute.xlu0 0
      %471 = vperm.xlu0 %470, %v453
      %v472 = vpop.permute.xlu0 %471
      %475 = vset.pattern.permute.xlu0 0
      %476 = vperm.xlu0 %475, %v454
      %v477 = vpop.permute.xlu0 %476
      %480 = vset.pattern.permute.xlu0 0
      %481 = vperm.xlu0 %480, %v455
      %v482 = vpop.permute.xlu0 %481
      %485 = vset.pattern.permute.xlu0 0
      %486 = vperm.xlu0 %485, %v456
      %v487 = vpop.permute.xlu0 %486
      %490 = vset.pattern.permute.xlu0 0
      %491 = vperm.xlu0 %490, %v457
      %v492 = vpop.permute.xlu0 %491
      %495 = vset.pattern.permute.xlu0 0
      %496 = vperm.xlu0 %495, %v458
      %v497 = vpop.permute.xlu0 %496
      %v507 = vunpack.c.l.b16 %v443
      %v508 = vunpack.c.l.b16 %v444
      %v509 = vunpack.c.l.b16 %v445
      %v510 = vunpack.c.l.b16 %v446
      %v511 = vunpack.c.l.b16 %v447
      %v512 = vunpack.c.l.b16 %v448
      %v513 = vunpack.c.l.b16 %v449
      %v514 = vunpack.c.l.b16 %v450
      %v515 = vpack.c.b16 %v508, %v507
      %v516 = vpack.c.b16 %v510, %v509
      %v517 = vpack.c.b16 %v512, %v511
      %v518 = vpack.c.b16 %v514, %v513
      %v520 = vunpack.c.l.b16 %v442
      %v521 = vunpack.c.h.b16 %v442
      %v522 = vpack.c.b16 %v520, %v520
      %v523 = vpack.c.b16 %v521, %v521
      %vm524 = vcmask 64512
      %v526 = vsel %vm524, %v515, 0
      %v529 = vsel %vm524, %v516, 0
      %v532 = vsel %vm524, %v517, 0
      %v535 = vsel %vm524, %v518, 0
      %vm537 = vcmask 1043456
      %v539 = vsel %vm537, %v522, 0
      %v542 = vsel %vm537, %v523, 0
      %544 = vmatprep.subr.bf16.mxu0 %v542
      %545 = vmatpush1.bf16.msra.mxu0 %v539
      %546 = vmatprep.subr.bf16.mxu0 0
      %547 = vmatpush1.bf16.msra.mxu0 0
      %548 = vmatprep.subr.bf16.mxu0 0
      %549 = vmatpush1.bf16.msra.mxu0 0
      %550 = vmatprep.subr.bf16.mxu0 0
      %551 = vmatpush1.bf16.msra.mxu0 0
      %552 = vmatprep.subr.bf16.mxu0 0
      %553 = vmatpush1.bf16.msra.mxu0 0
      %554 = vmatprep.subr.bf16.mxu0 0
      %555 = vmatpush1.bf16.msra.mxu0 0
      %556 = vmatprep.subr.bf16.mxu0 0
      %557 = vmatpush1.bf16.msra.mxu0 0
      %558 = vmatprep.subr.bf16.mxu0 0
      %559 = vmatpush1.bf16.msra.mxu0 0
      %560 = vmatprep.subr.bf16.mxu0 0
      %561 = vmatpush1.bf16.msra.mxu0 0
      %562 = vmatprep.subr.bf16.mxu0 0
      %563 = vmatpush1.bf16.msra.mxu0 0
      %564 = vmatprep.subr.bf16.mxu0 0
      %565 = vmatpush1.bf16.msra.mxu0 0
      %566 = vmatprep.subr.bf16.mxu0 0
      %567 = vmatpush1.bf16.msra.mxu0 0
      %568 = vmatprep.subr.bf16.mxu0 0
      %569 = vmatpush1.bf16.msra.mxu0 0
      %570 = vmatprep.subr.bf16.mxu0 0
      %571 = vmatpush1.bf16.msra.mxu0 0
      %572 = vmatprep.subr.bf16.mxu0 0
      %573 = vmatpush1.bf16.msra.mxu0 0
      %574 = vmatprep.subr.bf16.mxu0 0
      %575 = vmatpush1.bf16.msra.mxu0 0
      %576 = vmatprep.mubr.bf16.mxu0 0
      %577 = vmatmul.mubr.bf16.gmra.mrb[0].mxu0 %v526
      %v578 = vpop.f32.mrb[0].mxu0
      %v579 = vadd.f32 %v462, %v578
      %v580 = vpop.f32.mrb[0].mxu0
      %v581 = vadd.f32 %v462, %v580
      %v582 = vpop.f32.mrb[0].mxu0
      %v583 = vadd.f32 %v467, %v582
      %v584 = vpop.f32.mrb[0].mxu0
      %v585 = vadd.f32 %v467, %v584
      %586 = vmatprep.mubr.bf16.mxu0 0
      %587 = vmatmul.mubr.bf16.gmra.mrb[0].mxu0 %v529
      %v588 = vpop.f32.mrb[0].mxu0
      %v589 = vadd.f32 %v472, %v588
      %v590 = vpop.f32.mrb[0].mxu0
      %v591 = vadd.f32 %v472, %v590
      %v592 = vpop.f32.mrb[0].mxu0
      %v593 = vadd.f32 %v477, %v592
      %v594 = vpop.f32.mrb[0].mxu0
      %v595 = vadd.f32 %v477, %v594
      %596 = vmatprep.mubr.bf16.mxu0 0
      %597 = vmatmul.mubr.bf16.gmra.mrb[0].mxu0 %v532
      %v598 = vpop.f32.mrb[0].mxu0
      %v599 = vadd.f32 %v482, %v598
      %v600 = vpop.f32.mrb[0].mxu0
      %v601 = vadd.f32 %v482, %v600
      %v602 = vpop.f32.mrb[0].mxu0
      %v603 = vadd.f32 %v487, %v602
      %v604 = vpop.f32.mrb[0].mxu0
      %v605 = vadd.f32 %v487, %v604
      %606 = vmatprep.mubr.bf16.mxu0 0
      %607 = vmatmul.mubr.bf16.gmra.mrb[0].mxu0 %v535
      %v608 = vpop.f32.mrb[0].mxu0
      %v609 = vadd.f32 %v492, %v608
      %v610 = vpop.f32.mrb[0].mxu0
      %v611 = vadd.f32 %v492, %v610
      %v612 = vpop.f32.mrb[0].mxu0
      %v613 = vadd.f32 %v497, %v612
      %v614 = vpop.f32.mrb[0].mxu0
      %v615 = vadd.f32 %v497, %v614
      %616 = vdwg.mxu0
      %v617 = vmax.f32 %v579, 0.0
      %v618 = vmax.f32 %v581, 0.0
      %v619 = vmax.f32 %v583, 0.0
      %v620 = vmax.f32 %v585, 0.0
      %v621 = vmax.f32 %v589, 0.0
      %v622 = vmax.f32 %v591, 0.0
      %v623 = vmax.f32 %v593, 0.0
      %v624 = vmax.f32 %v595, 0.0
      %v625 = vmax.f32 %v599, 0.0
      %v626 = vmax.f32 %v601, 0.0
      %v627 = vmax.f32 %v603, 0.0
      %v628 = vmax.f32 %v605, 0.0
      %v629 = vmax.f32 %v609, 0.0
      %v630 = vmax.f32 %v611, 0.0
      %v631 = vmax.f32 %v613, 0.0
      %v632 = vmax.f32 %v615, 0.0
      %v633 = vpack.c.bf16 %v619, %v617
      %v634 = vpack.c.bf16 %v620, %v618
      %v635 = vpack.c.bf16 %v623, %v621
      %v636 = vpack.c.bf16 %v624, %v622
      %v637 = vpack.c.bf16 %v627, %v625
      %v638 = vpack.c.bf16 %v628, %v626
      %v639 = vpack.c.bf16 %v631, %v629
      %v640 = vpack.c.bf16 %v632, %v630
      %v641 = vld [vmem:[%s3] sm:$0xf]
      %v642 = vld [vmem:[%s3 + $0x4] sm:$0xf]
      %v643 = vld [vmem:[%s3 + $0x8] sm:$0xf]
      %v644 = vld [vmem:[%s3 + $0xc] sm:$0xf]
      %v645 = vld [vmem:[%s3 + $0x10] sm:$0xf]
      %v646 = vld [vmem:[%s3 + $0x14] sm:$0xf]
      %v647 = vld [vmem:[%s3 + $0x18] sm:$0xf]
      %v648 = vld [vmem:[%s3 + $0x1c] sm:$0xf]
      %v649 = vld [vmem:[%s3 + $0x20] sm:$0xf]
      %v650 = vld [vmem:[%s3 + $0x24] sm:$0xf]
      %v651 = vld [vmem:[%s3 + $0x28] sm:$0xf]
      %v652 = vld [vmem:[%s3 + $0x2c] sm:$0xf]
      %v653 = vld [vmem:[%s3 + $0x30] sm:$0xf]
      %v654 = vld [vmem:[%s3 + $0x34] sm:$0xf]
      %v655 = vld [vmem:[%s3 + $0x38] sm:$0xf]
      %v656 = vld [vmem:[%s3 + $0x3c] sm:$0xf]
      %v657 = vld [vmem:[%s4] sm:$0xff]
      %v658 = vld [vmem:[%s4 + $0x8] sm:$0xff]
      %v659 = vld [vmem:[%s4 + $0x10] sm:$0xff]
      %v660 = vld [vmem:[%s4 + $0x18] sm:$0xff]
      %v661 = vld [vmem:[%s4 + $0x20] sm:$0xff]
      %v662 = vld [vmem:[%s4 + $0x28] sm:$0xff]
      %v663 = vld [vmem:[%s4 + $0x30] sm:$0xff]
      %v664 = vld [vmem:[%s4 + $0x38] sm:$0xff]
      %v665 = vld [vmem:[%s4 + $0x40] sm:$0xff]
      %v666 = vld [vmem:[%s4 + $0x48] sm:$0xff]
      %v667 = vld [vmem:[%s4 + $0x50] sm:$0xff]
      %v668 = vld [vmem:[%s4 + $0x58] sm:$0xff]
      %v669 = vld [vmem:[%s4 + $0x60] sm:$0xff]
      %v670 = vld [vmem:[%s4 + $0x68] sm:$0xff]
      %v671 = vld [vmem:[%s4 + $0x70] sm:$0xff]
      %v672 = vld [vmem:[%s4 + $0x78] sm:$0xff]
      %674 = vset.pattern.permute.xlu0 0
      %675 = vperm.xlu0 %674, %v657
      %v676 = vpop.permute.xlu0 %675
      %679 = vset.pattern.permute.xlu0 0
      %680 = vperm.xlu0 %679, %v658
      %v681 = vpop.permute.xlu0 %680
      %684 = vset.pattern.permute.xlu0 0
      %685 = vperm.xlu0 %684, %v659
      %v686 = vpop.permute.xlu0 %685
      %689 = vset.pattern.permute.xlu0 0
      %690 = vperm.xlu0 %689, %v660
      %v691 = vpop.permute.xlu0 %690
      %694 = vset.pattern.permute.xlu0 0
      %695 = vperm.xlu0 %694, %v661
      %v696 = vpop.permute.xlu0 %695
      %699 = vset.pattern.permute.xlu0 0
      %700 = vperm.xlu0 %699, %v662
      %v701 = vpop.permute.xlu0 %700
      %704 = vset.pattern.permute.xlu0 0
      %705 = vperm.xlu0 %704, %v663
      %v706 = vpop.permute.xlu0 %705
      %709 = vset.pattern.permute.xlu0 0
      %710 = vperm.xlu0 %709, %v664
      %v711 = vpop.permute.xlu0 %710
      %714 = vset.pattern.permute.xlu0 0
      %715 = vperm.xlu0 %714, %v665
      %v716 = vpop.permute.xlu0 %715
      %719 = vset.pattern.permute.xlu0 0
      %720 = vperm.xlu0 %719, %v666
      %v721 = vpop.permute.xlu0 %720
      %724 = vset.pattern.permute.xlu0 0
      %725 = vperm.xlu0 %724, %v667
      %v726 = vpop.permute.xlu0 %725
      %729 = vset.pattern.permute.xlu0 0
      %730 = vperm.xlu0 %729, %v668
      %v731 = vpop.permute.xlu0 %730
      %734 = vset.pattern.permute.xlu0 0
      %735 = vperm.xlu0 %734, %v669
      %v736 = vpop.permute.xlu0 %735
      %739 = vset.pattern.permute.xlu0 0
      %740 = vperm.xlu0 %739, %v670
      %v741 = vpop.permute.xlu0 %740
      %744 = vset.pattern.permute.xlu0 0
      %745 = vperm.xlu0 %744, %v671
      %v746 = vpop.permute.xlu0 %745
      %749 = vset.pattern.permute.xlu0 0
      %750 = vperm.xlu0 %749, %v672
      %v751 = vpop.permute.xlu0 %750
      %v769 = vunpack.c.l.b16 %v641
      %v770 = vunpack.c.l.b16 %v642
      %v771 = vunpack.c.l.b16 %v643
      %v772 = vunpack.c.l.b16 %v644
      %v773 = vunpack.c.l.b16 %v645
      %v774 = vunpack.c.l.b16 %v646
      %v775 = vunpack.c.l.b16 %v647
      %v776 = vunpack.c.l.b16 %v648
      %v777 = vunpack.c.l.b16 %v649
      %v778 = vunpack.c.l.b16 %v650
      %v779 = vunpack.c.l.b16 %v651
      %v780 = vunpack.c.l.b16 %v652
      %v781 = vunpack.c.l.b16 %v653
      %v782 = vunpack.c.l.b16 %v654
      %v783 = vunpack.c.l.b16 %v655
      %v784 = vunpack.c.l.b16 %v656
      %v785 = vpack.c.b16 %v770, %v769
      %v786 = vpack.c.b16 %v772, %v771
      %v787 = vpack.c.b16 %v774, %v773
      %v788 = vpack.c.b16 %v776, %v775
      %v789 = vpack.c.b16 %v778, %v777
      %v790 = vpack.c.b16 %v780, %v779
      %v791 = vpack.c.b16 %v782, %v781
      %v792 = vpack.c.b16 %v784, %v783
      %vm793 = vcmask 523264
      %v795 = vsel %vm793, %v785, 0
      %v798 = vsel %vm793, %v786, 0
      %v801 = vsel %vm793, %v787, 0
      %v804 = vsel %vm793, %v788, 0
      %v807 = vsel %vm793, %v789, 0
      %v810 = vsel %vm793, %v790, 0
      %v813 = vsel %vm793, %v791, 0
      %v816 = vsel %vm793, %v792, 0
      %818 = vmatprep.subr.bf16.mxu0 %v634
      %819 = vmatpush1.bf16.msra.mxu0 %v633
      %820 = vmatprep.subr.bf16.mxu0 %v636
      %821 = vmatpush1.bf16.msra.mxu0 %v635
      %822 = vmatprep.subr.bf16.mxu0 %v638
      %823 = vmatpush1.bf16.msra.mxu0 %v637
      %824 = vmatprep.subr.bf16.mxu0 %v640
      %825 = vmatpush1.bf16.msra.mxu0 %v639
      %826 = vmatprep.subr.bf16.mxu0 0
      %827 = vmatpush1.bf16.msra.mxu0 0
      %828 = vmatprep.subr.bf16.mxu0 0
      %829 = vmatpush1.bf16.msra.mxu0 0
      %830 = vmatprep.subr.bf16.mxu0 0
      %831 = vmatpush1.bf16.msra.mxu0 0
      %832 = vmatprep.subr.bf16.mxu0 0
      %833 = vmatpush1.bf16.msra.mxu0 0
      %834 = vmatprep.subr.bf16.mxu0 0
      %835 = vmatpush1.bf16.msra.mxu0 0
      %836 = vmatprep.subr.bf16.mxu0 0
      %837 = vmatpush1.bf16.msra.mxu0 0
      %838 = vmatprep.subr.bf16.mxu0 0
      %839 = vmatpush1.bf16.msra.mxu0 0
      %840 = vmatprep.subr.bf16.mxu0 0
      %841 = vmatpush1.bf16.msra.mxu0 0
      %842 = vmatprep.subr.bf16.mxu0 0
      %843 = vmatpush1.bf16.msra.mxu0 0
      %844 = vmatprep.subr.bf16.mxu0 0
      %845 = vmatpush1.bf16.msra.mxu0 0
      %846 = vmatprep.subr.bf16.mxu0 0
      %847 = vmatpush1.bf16.msra.mxu0 0
      %848 = vmatprep.subr.bf16.mxu0 0
      %849 = vmatpush1.bf16.msra.mxu0 0
      %850 = vmatprep.mubr.bf16.mxu0 0
      %851 = vmatmul.mubr.bf16.gmra.mrb[0].mxu0 %v795
      %v852 = vpop.f32.mrb[0].mxu0
      %v853 = vadd.f32 %v676, %v852
      %v854 = vpop.f32.mrb[0].mxu0
      %v855 = vadd.f32 %v676, %v854
      %v856 = vpop.f32.mrb[0].mxu0
      %v857 = vadd.f32 %v681, %v856
      %v858 = vpop.f32.mrb[0].mxu0
      %v859 = vadd.f32 %v681, %v858
      %860 = vmatprep.mubr.bf16.mxu0 0
      %861 = vmatmul.mubr.bf16.gmra.mrb[0].mxu0 %v798
      %v862 = vpop.f32.mrb[0].mxu0
      %v863 = vadd.f32 %v686, %v862
      %v864 = vpop.f32.mrb[0].mxu0
      %v865 = vadd.f32 %v686, %v864
      %v866 = vpop.f32.mrb[0].mxu0
      %v867 = vadd.f32 %v691, %v866
      %v868 = vpop.f32.mrb[0].mxu0
      %v869 = vadd.f32 %v691, %v868
      %870 = vmatprep.mubr.bf16.mxu0 0
      %871 = vmatmul.mubr.bf16.gmra.mrb[0].mxu0 %v801
      %v872 = vpop.f32.mrb[0].mxu0
      %v873 = vadd.f32 %v696, %v872
      %v874 = vpop.f32.mrb[0].mxu0
      %v875 = vadd.f32 %v696, %v874
      %v876 = vpop.f32.mrb[0].mxu0
      %v877 = vadd.f32 %v701, %v876
      %v878 = vpop.f32.mrb[0].mxu0
      %v879 = vadd.f32 %v701, %v878
      %880 = vmatprep.mubr.bf16.mxu0 0
      %881 = vmatmul.mubr.bf16.gmra.mrb[0].mxu0 %v804
      %v882 = vpop.f32.mrb[0].mxu0
      %v883 = vadd.f32 %v706, %v882
      %v884 = vpop.f32.mrb[0].mxu0
      %v885 = vadd.f32 %v706, %v884
      %v886 = vpop.f32.mrb[0].mxu0
      %v887 = vadd.f32 %v711, %v886
      %v888 = vpop.f32.mrb[0].mxu0
      %v889 = vadd.f32 %v711, %v888
      %890 = vmatprep.mubr.bf16.mxu0 0
      %891 = vmatmul.mubr.bf16.gmra.mrb[0].mxu0 %v807
      %v892 = vpop.f32.mrb[0].mxu0
      %v893 = vadd.f32 %v716, %v892
      %v894 = vpop.f32.mrb[0].mxu0
      %v895 = vadd.f32 %v716, %v894
      %v896 = vpop.f32.mrb[0].mxu0
      %v897 = vadd.f32 %v721, %v896
      %v898 = vpop.f32.mrb[0].mxu0
      %v899 = vadd.f32 %v721, %v898
      %900 = vmatprep.mubr.bf16.mxu0 0
      %901 = vmatmul.mubr.bf16.gmra.mrb[0].mxu0 %v810
      %v902 = vpop.f32.mrb[0].mxu0
      %v903 = vadd.f32 %v726, %v902
      %v904 = vpop.f32.mrb[0].mxu0
      %v905 = vadd.f32 %v726, %v904
      %v906 = vpop.f32.mrb[0].mxu0
      %v907 = vadd.f32 %v731, %v906
      %v908 = vpop.f32.mrb[0].mxu0
      %v909 = vadd.f32 %v731, %v908
      %910 = vmatprep.mubr.bf16.mxu0 0
      %911 = vmatmul.mubr.bf16.gmra.mrb[0].mxu0 %v813
      %v912 = vpop.f32.mrb[0].mxu0
      %v913 = vadd.f32 %v736, %v912
      %v914 = vpop.f32.mrb[0].mxu0
      %v915 = vadd.f32 %v736, %v914
      %v916 = vpop.f32.mrb[0].mxu0
      %v917 = vadd.f32 %v741, %v916
      %v918 = vpop.f32.mrb[0].mxu0
      %v919 = vadd.f32 %v741, %v918
      %920 = vmatprep.mubr.bf16.mxu0 0
      %921 = vmatmul.mubr.bf16.gmra.mrb[0].mxu0 %v816
      %v922 = vpop.f32.mrb[0].mxu0
      %v923 = vadd.f32 %v746, %v922
      %v924 = vpop.f32.mrb[0].mxu0
      %v925 = vadd.f32 %v746, %v924
      %v926 = vpop.f32.mrb[0].mxu0
      %v927 = vadd.f32 %v751, %v926
      %v928 = vpop.f32.mrb[0].mxu0
      %v929 = vadd.f32 %v751, %v928
      %930 = vdwg.mxu0
      %v931 = vmax.f32 %v853, 0.0
      %v932 = vmax.f32 %v855, 0.0
      %v933 = vmax.f32 %v857, 0.0
      %v934 = vmax.f32 %v859, 0.0
      %v935 = vmax.f32 %v863, 0.0
      %v936 = vmax.f32 %v865, 0.0
      %v937 = vmax.f32 %v867, 0.0
      %v938 = vmax.f32 %v869, 0.0
      %v939 = vmax.f32 %v873, 0.0
      %v940 = vmax.f32 %v875, 0.0
      %v941 = vmax.f32 %v877, 0.0
      %v942 = vmax.f32 %v879, 0.0
      %v943 = vmax.f32 %v883, 0.0
      %v944 = vmax.f32 %v885, 0.0
      %v945 = vmax.f32 %v887, 0.0
      %v946 = vmax.f32 %v889, 0.0
      %v947 = vmax.f32 %v893, 0.0
      %v948 = vmax.f32 %v895, 0.0
      %v949 = vmax.f32 %v897, 0.0
      %v950 = vmax.f32 %v899, 0.0
      %v951 = vmax.f32 %v903, 0.0
      %v952 = vmax.f32 %v905, 0.0
      %v953 = vmax.f32 %v907, 0.0
      %v954 = vmax.f32 %v909, 0.0
      %v955 = vmax.f32 %v913, 0.0
      %v956 = vmax.f32 %v915, 0.0
      %v957 = vmax.f32 %v917, 0.0
      %v958 = vmax.f32 %v919, 0.0
      %v959 = vmax.f32 %v923, 0.0
      %v960 = vmax.f32 %v925, 0.0
      %v961 = vmax.f32 %v927, 0.0
      %v962 = vmax.f32 %v929, 0.0
      %v963 = vpack.c.bf16 %v933, %v931
      %v964 = vpack.c.bf16 %v934, %v932
      %v965 = vpack.c.bf16 %v937, %v935
      %v966 = vpack.c.bf16 %v938, %v936
      %v967 = vpack.c.bf16 %v941, %v939
      %v968 = vpack.c.bf16 %v942, %v940
      %v969 = vpack.c.bf16 %v945, %v943
      %v970 = vpack.c.bf16 %v946, %v944
      %v971 = vpack.c.bf16 %v949, %v947
      %v972 = vpack.c.bf16 %v950, %v948
      %v973 = vpack.c.bf16 %v953, %v951
      %v974 = vpack.c.bf16 %v954, %v952
      %v975 = vpack.c.bf16 %v957, %v955
      %v976 = vpack.c.bf16 %v958, %v956
      %v977 = vpack.c.bf16 %v961, %v959
      %v978 = vpack.c.bf16 %v962, %v960
      %v979 = vld [vmem:[%s5] sm:$0xf]
      %v980 = vld [vmem:[%s5 + $0x4] sm:$0xf]
      %v981 = vld [vmem:[%s5 + $0x8] sm:$0xf]
      %v982 = vld [vmem:[%s5 + $0xc] sm:$0xf]
      %v983 = vld [vmem:[%s5 + $0x10] sm:$0xf]
      %v984 = vld [vmem:[%s5 + $0x14] sm:$0xf]
      %v985 = vld [vmem:[%s5 + $0x18] sm:$0xf]
      %v986 = vld [vmem:[%s5 + $0x1c] sm:$0xf]
      %v987 = vld [vmem:[%s5 + $0x20] sm:$0xf]
      %v988 = vld [vmem:[%s5 + $0x24] sm:$0xf]
      %v989 = vld [vmem:[%s5 + $0x28] sm:$0xf]
      %v990 = vld [vmem:[%s5 + $0x2c] sm:$0xf]
      %v991 = vld [vmem:[%s5 + $0x30] sm:$0xf]
      %v992 = vld [vmem:[%s5 + $0x34] sm:$0xf]
      %v993 = vld [vmem:[%s5 + $0x38] sm:$0xf]
      %v994 = vld [vmem:[%s5 + $0x3c] sm:$0xf]
      %v995 = vld [vmem:[%s6] sm:$0xff]
      %v996 = vld [vmem:[%s6 + $0x8] sm:$0xff]
      %v997 = vld [vmem:[%s6 + $0x10] sm:$0xff]
      %v998 = vld [vmem:[%s6 + $0x18] sm:$0xff]
      %v999 = vld [vmem:[%s6 + $0x20] sm:$0xff]
      %v1000 = vld [vmem:[%s6 + $0x28] sm:$0xff]
      %v1001 = vld [vmem:[%s6 + $0x30] sm:$0xff]
      %v1002 = vld [vmem:[%s6 + $0x38] sm:$0xff]
      %v1003 = vld [vmem:[%s6 + $0x40] sm:$0xff]
      %v1004 = vld [vmem:[%s6 + $0x48] sm:$0xff]
      %v1005 = vld [vmem:[%s6 + $0x50] sm:$0xff]
      %v1006 = vld [vmem:[%s6 + $0x58] sm:$0xff]
      %v1007 = vld [vmem:[%s6 + $0x60] sm:$0xff]
      %v1008 = vld [vmem:[%s6 + $0x68] sm:$0xff]
      %v1009 = vld [vmem:[%s6 + $0x70] sm:$0xff]
      %v1010 = vld [vmem:[%s6 + $0x78] sm:$0xff]
      %1012 = vset.pattern.permute.xlu0 0
      %1013 = vperm.xlu0 %1012, %v995
      %v1014 = vpop.permute.xlu0 %1013
      %1017 = vset.pattern.permute.xlu0 0
      %1018 = vperm.xlu0 %1017, %v996
      %v1019 = vpop.permute.xlu0 %1018
      %1022 = vset.pattern.permute.xlu0 0
      %1023 = vperm.xlu0 %1022, %v997
      %v1024 = vpop.permute.xlu0 %1023
      %1027 = vset.pattern.permute.xlu0 0
      %1028 = vperm.xlu0 %1027, %v998
      %v1029 = vpop.permute.xlu0 %1028
      %1032 = vset.pattern.permute.xlu0 0
      %1033 = vperm.xlu0 %1032, %v999
      %v1034 = vpop.permute.xlu0 %1033
      %1037 = vset.pattern.permute.xlu0 0
      %1038 = vperm.xlu0 %1037, %v1000
      %v1039 = vpop.permute.xlu0 %1038
      %1042 = vset.pattern.permute.xlu0 0
      %1043 = vperm.xlu0 %1042, %v1001
      %v1044 = vpop.permute.xlu0 %1043
      %1047 = vset.pattern.permute.xlu0 0
      %1048 = vperm.xlu0 %1047, %v1002
      %v1049 = vpop.permute.xlu0 %1048
      %1052 = vset.pattern.permute.xlu0 0
      %1053 = vperm.xlu0 %1052, %v1003
      %v1054 = vpop.permute.xlu0 %1053
      %1057 = vset.pattern.permute.xlu0 0
      %1058 = vperm.xlu0 %1057, %v1004
      %v1059 = vpop.permute.xlu0 %1058
      %1062 = vset.pattern.permute.xlu0 0
      %1063 = vperm.xlu0 %1062, %v1005
      %v1064 = vpop.permute.xlu0 %1063
      %1067 = vset.pattern.permute.xlu0 0
      %1068 = vperm.xlu0 %1067, %v1006
      %v1069 = vpop.permute.xlu0 %1068
      %1072 = vset.pattern.permute.xlu0 0
      %1073 = vperm.xlu0 %1072, %v1007
      %v1074 = vpop.permute.xlu0 %1073
      %1077 = vset.pattern.permute.xlu0 0
      %1078 = vperm.xlu0 %1077, %v1008
      %v1079 = vpop.permute.xlu0 %1078
      %1082 = vset.pattern.permute.xlu0 0
      %1083 = vperm.xlu0 %1082, %v1009
      %v1084 = vpop.permute.xlu0 %1083
      %1087 = vset.pattern.permute.xlu0 0
      %1088 = vperm.xlu0 %1087, %v1010
      %v1089 = vpop.permute.xlu0 %1088
      %v1107 = vunpack.c.l.b16 %v979
      %v1108 = vunpack.c.l.b16 %v980
      %v1109 = vunpack.c.l.b16 %v981
      %v1110 = vunpack.c.l.b16 %v982
      %v1111 = vunpack.c.l.b16 %v983
      %v1112 = vunpack.c.l.b16 %v984
      %v1113 = vunpack.c.l.b16 %v985
      %v1114 = vunpack.c.l.b16 %v986
      %v1115 = vunpack.c.l.b16 %v987
      %v1116 = vunpack.c.l.b16 %v988
      %v1117 = vunpack.c.l.b16 %v989
      %v1118 = vunpack.c.l.b16 %v990
      %v1119 = vunpack.c.l.b16 %v991
      %v1120 = vunpack.c.l.b16 %v992
      %v1121 = vunpack.c.l.b16 %v993
      %v1122 = vunpack.c.l.b16 %v994
      %v1123 = vpack.c.b16 %v1108, %v1107
      %v1124 = vpack.c.b16 %v1110, %v1109
      %v1125 = vpack.c.b16 %v1112, %v1111
      %v1126 = vpack.c.b16 %v1114, %v1113
      %v1127 = vpack.c.b16 %v1116, %v1115
      %v1128 = vpack.c.b16 %v1118, %v1117
      %v1129 = vpack.c.b16 %v1120, %v1119
      %v1130 = vpack.c.b16 %v1122, %v1121
      %1139 = vmatprep.subr.bf16.mxu0 %v964
      %1140 = vmatpush1.bf16.msra.mxu0 %v963
      %1141 = vmatprep.subr.bf16.mxu0 %v966
      %1142 = vmatpush1.bf16.msra.mxu0 %v965
      %1143 = vmatprep.subr.bf16.mxu0 %v968
      %1144 = vmatpush1.bf16.msra.mxu0 %v967
      %1145 = vmatprep.subr.bf16.mxu0 %v970
      %1146 = vmatpush1.bf16.msra.mxu0 %v969
      %1147 = vmatprep.subr.bf16.mxu0 %v972
      %1148 = vmatpush1.bf16.msra.mxu0 %v971
      %1149 = vmatprep.subr.bf16.mxu0 %v974
      %1150 = vmatpush1.bf16.msra.mxu0 %v973
      %1151 = vmatprep.subr.bf16.mxu0 %v976
      %1152 = vmatpush1.bf16.msra.mxu0 %v975
      %1153 = vmatprep.subr.bf16.mxu0 %v978
      %1154 = vmatpush1.bf16.msra.mxu0 %v977
      %1155 = vmatprep.subr.bf16.mxu0 0
      %1156 = vmatpush1.bf16.msra.mxu0 0
      %1157 = vmatprep.subr.bf16.mxu0 0
      %1158 = vmatpush1.bf16.msra.mxu0 0
      %1159 = vmatprep.subr.bf16.mxu0 0
      %1160 = vmatpush1.bf16.msra.mxu0 0
      %1161 = vmatprep.subr.bf16.mxu0 0
      %1162 = vmatpush1.bf16.msra.mxu0 0
      %1163 = vmatprep.subr.bf16.mxu0 0
      %1164 = vmatpush1.bf16.msra.mxu0 0
      %1165 = vmatprep.subr.bf16.mxu0 0
      %1166 = vmatpush1.bf16.msra.mxu0 0
      %1167 = vmatprep.subr.bf16.mxu0 0
      %1168 = vmatpush1.bf16.msra.mxu0 0
      %1169 = vmatprep.subr.bf16.mxu0 0
      %1170 = vmatpush1.bf16.msra.mxu0 0
      %1171 = vmatprep.mubr.bf16.mxu0 0
      %1172 = vmatmul.mubr.bf16.gmra.mrb[0].mxu0 %v1123
      %v1173 = vpop.f32.mrb[0].mxu0
      %v1174 = vadd.f32 %v1014, %v1173
      %v1175 = vpop.f32.mrb[0].mxu0
      %v1176 = vadd.f32 %v1014, %v1175
      %v1177 = vpop.f32.mrb[0].mxu0
      %v1178 = vadd.f32 %v1019, %v1177
      %v1179 = vpop.f32.mrb[0].mxu0
      %v1180 = vadd.f32 %v1019, %v1179
      %1181 = vmatprep.mubr.bf16.mxu0 0
      %1182 = vmatmul.mubr.bf16.gmra.mrb[0].mxu0 %v1124
      %v1183 = vpop.f32.mrb[0].mxu0
      %v1184 = vadd.f32 %v1024, %v1183
      %v1185 = vpop.f32.mrb[0].mxu0
      %v1186 = vadd.f32 %v1024, %v1185
      %v1187 = vpop.f32.mrb[0].mxu0
      %v1188 = vadd.f32 %v1029, %v1187
      %v1189 = vpop.f32.mrb[0].mxu0
      %v1190 = vadd.f32 %v1029, %v1189
      %1191 = vmatprep.mubr.bf16.mxu0 0
      %1192 = vmatmul.mubr.bf16.gmra.mrb[0].mxu0 %v1125
      %v1193 = vpop.f32.mrb[0].mxu0
      %v1194 = vadd.f32 %v1034, %v1193
      %v1195 = vpop.f32.mrb[0].mxu0
      %v1196 = vadd.f32 %v1034, %v1195
      %v1197 = vpop.f32.mrb[0].mxu0
      %v1198 = vadd.f32 %v1039, %v1197
      %v1199 = vpop.f32.mrb[0].mxu0
      %v1200 = vadd.f32 %v1039, %v1199
      %1201 = vmatprep.mubr.bf16.mxu0 0
      %1202 = vmatmul.mubr.bf16.gmra.mrb[0].mxu0 %v1126
      %v1203 = vpop.f32.mrb[0].mxu0
      %v1204 = vadd.f32 %v1044, %v1203
      %v1205 = vpop.f32.mrb[0].mxu0
      %v1206 = vadd.f32 %v1044, %v1205
      %v1207 = vpop.f32.mrb[0].mxu0
      %v1208 = vadd.f32 %v1049, %v1207
      %v1209 = vpop.f32.mrb[0].mxu0
      %v1210 = vadd.f32 %v1049, %v1209
      %1211 = vmatprep.mubr.bf16.mxu0 0
      %1212 = vmatmul.mubr.bf16.gmra.mrb[0].mxu0 %v1127
      %v1213 = vpop.f32.mrb[0].mxu0
      %v1214 = vadd.f32 %v1054, %v1213
      %v1215 = vpop.f32.mrb[0].mxu0
      %v1216 = vadd.f32 %v1054, %v1215
      %v1217 = vpop.f32.mrb[0].mxu0
      %v1218 = vadd.f32 %v1059, %v1217
      %v1219 = vpop.f32.mrb[0].mxu0
      %v1220 = vadd.f32 %v1059, %v1219
      %1221 = vmatprep.mubr.bf16.mxu0 0
      %1222 = vmatmul.mubr.bf16.gmra.mrb[0].mxu0 %v1128
      %v1223 = vpop.f32.mrb[0].mxu0
      %v1224 = vadd.f32 %v1064, %v1223
      %v1225 = vpop.f32.mrb[0].mxu0
      %v1226 = vadd.f32 %v1064, %v1225
      %v1227 = vpop.f32.mrb[0].mxu0
      %v1228 = vadd.f32 %v1069, %v1227
      %v1229 = vpop.f32.mrb[0].mxu0
      %v1230 = vadd.f32 %v1069, %v1229
      %1231 = vmatprep.mubr.bf16.mxu0 0
      %1232 = vmatmul.mubr.bf16.gmra.mrb[0].mxu0 %v1129
      %v1233 = vpop.f32.mrb[0].mxu0
      %v1234 = vadd.f32 %v1074, %v1233
      %v1235 = vpop.f32.mrb[0].mxu0
      %v1236 = vadd.f32 %v1074, %v1235
      %v1237 = vpop.f32.mrb[0].mxu0
      %v1238 = vadd.f32 %v1079, %v1237
      %v1239 = vpop.f32.mrb[0].mxu0
      %v1240 = vadd.f32 %v1079, %v1239
      %1241 = vmatprep.mubr.bf16.mxu0 0
      %1242 = vmatmul.mubr.bf16.gmra.mrb[0].mxu0 %v1130
      %v1243 = vpop.f32.mrb[0].mxu0
      %v1244 = vadd.f32 %v1084, %v1243
      %v1245 = vpop.f32.mrb[0].mxu0
      %v1246 = vadd.f32 %v1084, %v1245
      %v1247 = vpop.f32.mrb[0].mxu0
      %v1248 = vadd.f32 %v1089, %v1247
      %v1249 = vpop.f32.mrb[0].mxu0
      %v1250 = vadd.f32 %v1089, %v1249
      %1251 = vdwg.mxu0
      %v1252 = vmax.f32 %v1174, 0.0
      %v1253 = vmax.f32 %v1176, 0.0
      %v1254 = vmax.f32 %v1178, 0.0
      %v1255 = vmax.f32 %v1180, 0.0
      %v1256 = vmax.f32 %v1184, 0.0
      %v1257 = vmax.f32 %v1186, 0.0
      %v1258 = vmax.f32 %v1188, 0.0
      %v1259 = vmax.f32 %v1190, 0.0
      %v1260 = vmax.f32 %v1194, 0.0
      %v1261 = vmax.f32 %v1196, 0.0
      %v1262 = vmax.f32 %v1198, 0.0
      %v1263 = vmax.f32 %v1200, 0.0
      %v1264 = vmax.f32 %v1204, 0.0
      %v1265 = vmax.f32 %v1206, 0.0
      %v1266 = vmax.f32 %v1208, 0.0
      %v1267 = vmax.f32 %v1210, 0.0
      %v1268 = vmax.f32 %v1214, 0.0
      %v1269 = vmax.f32 %v1216, 0.0
      %v1270 = vmax.f32 %v1218, 0.0
      %v1271 = vmax.f32 %v1220, 0.0
      %v1272 = vmax.f32 %v1224, 0.0
      %v1273 = vmax.f32 %v1226, 0.0
      %v1274 = vmax.f32 %v1228, 0.0
      %v1275 = vmax.f32 %v1230, 0.0
      %v1276 = vmax.f32 %v1234, 0.0
      %v1277 = vmax.f32 %v1236, 0.0
      %v1278 = vmax.f32 %v1238, 0.0
      %v1279 = vmax.f32 %v1240, 0.0
      %v1280 = vmax.f32 %v1244, 0.0
      %v1281 = vmax.f32 %v1246, 0.0
      %v1282 = vmax.f32 %v1248, 0.0
      %v1283 = vmax.f32 %v1250, 0.0
      %v1284 = vpack.c.bf16 %v1254, %v1252
      %v1285 = vpack.c.bf16 %v1255, %v1253
      %v1286 = vpack.c.bf16 %v1258, %v1256
      %v1287 = vpack.c.bf16 %v1259, %v1257
      %v1288 = vpack.c.bf16 %v1262, %v1260
      %v1289 = vpack.c.bf16 %v1263, %v1261
      %v1290 = vpack.c.bf16 %v1266, %v1264
      %v1291 = vpack.c.bf16 %v1267, %v1265
      %v1292 = vpack.c.bf16 %v1270, %v1268
      %v1293 = vpack.c.bf16 %v1271, %v1269
      %v1294 = vpack.c.bf16 %v1274, %v1272
      %v1295 = vpack.c.bf16 %v1275, %v1273
      %v1296 = vpack.c.bf16 %v1278, %v1276
      %v1297 = vpack.c.bf16 %v1279, %v1277
      %v1298 = vpack.c.bf16 %v1282, %v1280
      %v1299 = vpack.c.bf16 %v1283, %v1281
      %v1300 = vld [vmem:[%s7] sm:$0xf]
      %v1301 = vld [vmem:[%s7 + $0x4] sm:$0xf]
      %v1302 = vld [vmem:[%s7 + $0x8] sm:$0xf]
      %v1303 = vld [vmem:[%s7 + $0xc] sm:$0xf]
      %v1304 = vld [vmem:[%s7 + $0x10] sm:$0xf]
      %v1305 = vld [vmem:[%s7 + $0x14] sm:$0xf]
      %v1306 = vld [vmem:[%s7 + $0x18] sm:$0xf]
      %v1307 = vld [vmem:[%s7 + $0x1c] sm:$0xf]
      %v1308 = vld [vmem:[%s8] sm:$0xff]
      %v1309 = vld [vmem:[%s8 + $0x8] sm:$0xff]
      %v1310 = vld [vmem:[%s8 + $0x10] sm:$0xff]
      %v1311 = vld [vmem:[%s8 + $0x18] sm:$0xff]
      %v1312 = vld [vmem:[%s8 + $0x20] sm:$0xff]
      %v1313 = vld [vmem:[%s8 + $0x28] sm:$0xff]
      %v1314 = vld [vmem:[%s8 + $0x30] sm:$0xff]
      %v1315 = vld [vmem:[%s8 + $0x38] sm:$0xff]
      %1317 = vset.pattern.permute.xlu0 0
      %1318 = vperm.xlu0 %1317, %v1308
      %v1319 = vpop.permute.xlu0 %1318
      %1322 = vset.pattern.permute.xlu0 0
      %1323 = vperm.xlu0 %1322, %v1309
      %v1324 = vpop.permute.xlu0 %1323
      %1327 = vset.pattern.permute.xlu0 0
      %1328 = vperm.xlu0 %1327, %v1310
      %v1329 = vpop.permute.xlu0 %1328
      %1332 = vset.pattern.permute.xlu0 0
      %1333 = vperm.xlu0 %1332, %v1311
      %v1334 = vpop.permute.xlu0 %1333
      %1337 = vset.pattern.permute.xlu0 0
      %1338 = vperm.xlu0 %1337, %v1312
      %v1339 = vpop.permute.xlu0 %1338
      %1342 = vset.pattern.permute.xlu0 0
      %1343 = vperm.xlu0 %1342, %v1313
      %v1344 = vpop.permute.xlu0 %1343
      %1347 = vset.pattern.permute.xlu0 0
      %1348 = vperm.xlu0 %1347, %v1314
      %v1349 = vpop.permute.xlu0 %1348
      %1352 = vset.pattern.permute.xlu0 0
      %1353 = vperm.xlu0 %1352, %v1315
      %v1354 = vpop.permute.xlu0 %1353
      %v1364 = vunpack.c.l.b16 %v1300
      %v1365 = vunpack.c.l.b16 %v1301
      %v1366 = vunpack.c.l.b16 %v1302
      %v1367 = vunpack.c.l.b16 %v1303
      %v1368 = vunpack.c.l.b16 %v1304
      %v1369 = vunpack.c.l.b16 %v1305
      %v1370 = vunpack.c.l.b16 %v1306
      %v1371 = vunpack.c.l.b16 %v1307
      %v1372 = vpack.c.b16 %v1365, %v1364
      %v1373 = vpack.c.b16 %v1367, %v1366
      %v1374 = vpack.c.b16 %v1369, %v1368
      %v1375 = vpack.c.b16 %v1371, %v1370
      %1380 = vmatprep.subr.bf16.mxu0 %v1285
      %1381 = vmatpush1.bf16.msra.mxu0 %v1284
      %1382 = vmatprep.subr.bf16.mxu0 %v1287
      %1383 = vmatpush1.bf16.msra.mxu0 %v1286
      %1384 = vmatprep.subr.bf16.mxu0 %v1289
      %1385 = vmatpush1.bf16.msra.mxu0 %v1288
      %1386 = vmatprep.subr.bf16.mxu0 %v1291
      %1387 = vmatpush1.bf16.msra.mxu0 %v1290
      %1388 = vmatprep.subr.bf16.mxu0 %v1293
      %1389 = vmatpush1.bf16.msra.mxu0 %v1292
      %1390 = vmatprep.subr.bf16.mxu0 %v1295
      %1391 = vmatpush1.bf16.msra.mxu0 %v1294
      %1392 = vmatprep.subr.bf16.mxu0 %v1297
      %1393 = vmatpush1.bf16.msra.mxu0 %v1296
      %1394 = vmatprep.subr.bf16.mxu0 %v1299
      %1395 = vmatpush1.bf16.msra.mxu0 %v1298
      %1396 = vmatprep.subr.bf16.mxu0 0
      %1397 = vmatpush1.bf16.msra.mxu0 0
      %1398 = vmatprep.subr.bf16.mxu0 0
      %1399 = vmatpush1.bf16.msra.mxu0 0
      %1400 = vmatprep.subr.bf16.mxu0 0
      %1401 = vmatpush1.bf16.msra.mxu0 0
      %1402 = vmatprep.subr.bf16.mxu0 0
      %1403 = vmatpush1.bf16.msra.mxu0 0
      %1404 = vmatprep.subr.bf16.mxu0 0
      %1405 = vmatpush1.bf16.msra.mxu0 0
      %1406 = vmatprep.subr.bf16.mxu0 0
      %1407 = vmatpush1.bf16.msra.mxu0 0
      %1408 = vmatprep.subr.bf16.mxu0 0
      %1409 = vmatpush1.bf16.msra.mxu0 0
      %1410 = vmatprep.subr.bf16.mxu0 0
      %1411 = vmatpush1.bf16.msra.mxu0 0
      %1412 = vmatprep.mubr.bf16.mxu0 0
      %1413 = vmatmul.mubr.bf16.gmra.mrb[0].mxu0 %v1372
      %v1414 = vpop.f32.mrb[0].mxu0
      %v1415 = vadd.f32 %v1319, %v1414
      %v1416 = vpop.f32.mrb[0].mxu0
      %v1417 = vadd.f32 %v1319, %v1416
      %v1418 = vpop.f32.mrb[0].mxu0
      %v1419 = vadd.f32 %v1324, %v1418
      %v1420 = vpop.f32.mrb[0].mxu0
      %v1421 = vadd.f32 %v1324, %v1420
      %1422 = vmatprep.mubr.bf16.mxu0 0
      %1423 = vmatmul.mubr.bf16.gmra.mrb[0].mxu0 %v1373
      %v1424 = vpop.f32.mrb[0].mxu0
      %v1425 = vadd.f32 %v1329, %v1424
      %v1426 = vpop.f32.mrb[0].mxu0
      %v1427 = vadd.f32 %v1329, %v1426
      %v1428 = vpop.f32.mrb[0].mxu0
      %v1429 = vadd.f32 %v1334, %v1428
      %v1430 = vpop.f32.mrb[0].mxu0
      %v1431 = vadd.f32 %v1334, %v1430
      %1432 = vmatprep.mubr.bf16.mxu0 0
      %1433 = vmatmul.mubr.bf16.gmra.mrb[0].mxu0 %v1374
      %v1434 = vpop.f32.mrb[0].mxu0
      %v1435 = vadd.f32 %v1339, %v1434
      %v1436 = vpop.f32.mrb[0].mxu0
      %v1437 = vadd.f32 %v1339, %v1436
      %v1438 = vpop.f32.mrb[0].mxu0
      %v1439 = vadd.f32 %v1344, %v1438
      %v1440 = vpop.f32.mrb[0].mxu0
      %v1441 = vadd.f32 %v1344, %v1440
      %1442 = vmatprep.mubr.bf16.mxu0 0
      %1443 = vmatmul.mubr.bf16.gmra.mrb[0].mxu0 %v1375
      %v1444 = vpop.f32.mrb[0].mxu0
      %v1445 = vadd.f32 %v1349, %v1444
      %v1446 = vpop.f32.mrb[0].mxu0
      %v1447 = vadd.f32 %v1349, %v1446
      %v1448 = vpop.f32.mrb[0].mxu0
      %v1449 = vadd.f32 %v1354, %v1448
      %v1450 = vpop.f32.mrb[0].mxu0
      %v1451 = vadd.f32 %v1354, %v1450
      %1452 = vdwg.mxu0
      %v1453 = vmax.f32 %v1415, 0.0
      %v1454 = vmax.f32 %v1417, 0.0
      %v1455 = vmax.f32 %v1419, 0.0
      %v1456 = vmax.f32 %v1421, 0.0
      %v1457 = vmax.f32 %v1425, 0.0
      %v1458 = vmax.f32 %v1427, 0.0
      %v1459 = vmax.f32 %v1429, 0.0
      %v1460 = vmax.f32 %v1431, 0.0
      %v1461 = vmax.f32 %v1435, 0.0
      %v1462 = vmax.f32 %v1437, 0.0
      %v1463 = vmax.f32 %v1439, 0.0
      %v1464 = vmax.f32 %v1441, 0.0
      %v1465 = vmax.f32 %v1445, 0.0
      %v1466 = vmax.f32 %v1447, 0.0
      %v1467 = vmax.f32 %v1449, 0.0
      %v1468 = vmax.f32 %v1451, 0.0
      %v1469 = vpack.c.bf16 %v1455, %v1453
      %v1470 = vpack.c.bf16 %v1456, %v1454
      %v1471 = vpack.c.bf16 %v1459, %v1457
      %v1472 = vpack.c.bf16 %v1460, %v1458
      %v1473 = vpack.c.bf16 %v1463, %v1461
      %v1474 = vpack.c.bf16 %v1464, %v1462
      %v1475 = vpack.c.bf16 %v1467, %v1465
      %v1476 = vpack.c.bf16 %v1468, %v1466
      %v1477 = vld [vmem:[%s9] sm:$0xf]
      %v1478 = vld [vmem:[%s9 + $0x4] sm:$0xf]
      %v1479 = vld [vmem:[%s9 + $0x8] sm:$0xf]
      %v1480 = vld [vmem:[%s9 + $0xc] sm:$0xf]
      %v1481 = vld [vmem:[%s10] sm:$0xff]
      %v1482 = vld [vmem:[%s10 + $0x8] sm:$0xff]
      %v1483 = vld [vmem:[%s10 + $0x10] sm:$0xff]
      %v1484 = vld [vmem:[%s10 + $0x18] sm:$0xff]
      %1486 = vset.pattern.permute.xlu0 0
      %1487 = vperm.xlu0 %1486, %v1481
      %v1488 = vpop.permute.xlu0 %1487
      %1491 = vset.pattern.permute.xlu0 0
      %1492 = vperm.xlu0 %1491, %v1482
      %v1493 = vpop.permute.xlu0 %1492
      %1496 = vset.pattern.permute.xlu0 0
      %1497 = vperm.xlu0 %1496, %v1483
      %v1498 = vpop.permute.xlu0 %1497
      %1501 = vset.pattern.permute.xlu0 0
      %1502 = vperm.xlu0 %1501, %v1484
      %v1503 = vpop.permute.xlu0 %1502
      %v1509 = vunpack.c.l.b16 %v1477
      %v1510 = vunpack.c.l.b16 %v1478
      %v1511 = vunpack.c.l.b16 %v1479
      %v1512 = vunpack.c.l.b16 %v1480
      %v1513 = vpack.c.b16 %v1510, %v1509
      %v1514 = vpack.c.b16 %v1512, %v1511
      %v1516 = vsel %vm793, %v1513, 0
      %v1519 = vsel %vm793, %v1514, 0
      %1521 = vmatprep.subr.bf16.mxu0 %v1470
      %1522 = vmatpush1.bf16.msra.mxu0 %v1469
      %1523 = vmatprep.subr.bf16.mxu0 %v1472
      %1524 = vmatpush1.bf16.msra.mxu0 %v1471
      %1525 = vmatprep.subr.bf16.mxu0 %v1474
      %1526 = vmatpush1.bf16.msra.mxu0 %v1473
      %1527 = vmatprep.subr.bf16.mxu0 %v1476
      %1528 = vmatpush1.bf16.msra.mxu0 %v1475
      %1529 = vmatprep.subr.bf16.mxu0 0
      %1530 = vmatpush1.bf16.msra.mxu0 0
      %1531 = vmatprep.subr.bf16.mxu0 0
      %1532 = vmatpush1.bf16.msra.mxu0 0
      %1533 = vmatprep.subr.bf16.mxu0 0
      %1534 = vmatpush1.bf16.msra.mxu0 0
      %1535 = vmatprep.subr.bf16.mxu0 0
      %1536 = vmatpush1.bf16.msra.mxu0 0
      %1537 = vmatprep.subr.bf16.mxu0 0
      %1538 = vmatpush1.bf16.msra.mxu0 0
      %1539 = vmatprep.subr.bf16.mxu0 0
      %1540 = vmatpush1.bf16.msra.mxu0 0
      %1541 = vmatprep.subr.bf16.mxu0 0
      %1542 = vmatpush1.bf16.msra.mxu0 0
      %1543 = vmatprep.subr.bf16.mxu0 0
      %1544 = vmatpush1.bf16.msra.mxu0 0
      %1545 = vmatprep.subr.bf16.mxu0 0
      %1546 = vmatpush1.bf16.msra.mxu0 0
      %1547 = vmatprep.subr.bf16.mxu0 0
      %1548 = vmatpush1.bf16.msra.mxu0 0
      %1549 = vmatprep.subr.bf16.mxu0 0
      %1550 = vmatpush1.bf16.msra.mxu0 0
      %1551 = vmatprep.subr.bf16.mxu0 0
      %1552 = vmatpush1.bf16.msra.mxu0 0
      %1553 = vmatprep.mubr.bf16.mxu0 0
      %1554 = vmatmul.mubr.bf16.gmra.mrb[0].mxu0 %v1516
      %v1555 = vpop.f32.mrb[0].mxu0
      %v1556 = vadd.f32 %v1488, %v1555
      %v1557 = vpop.f32.mrb[0].mxu0
      %v1558 = vadd.f32 %v1488, %v1557
      %v1559 = vpop.f32.mrb[0].mxu0
      %v1560 = vadd.f32 %v1493, %v1559
      %v1561 = vpop.f32.mrb[0].mxu0
      %v1562 = vadd.f32 %v1493, %v1561
      %1563 = vmatprep.mubr.bf16.mxu0 0
      %1564 = vmatmul.mubr.bf16.gmra.mrb[0].mxu0 %v1519
      %v1565 = vpop.f32.mrb[0].mxu0
      %v1566 = vadd.f32 %v1498, %v1565
      %v1567 = vpop.f32.mrb[0].mxu0
      %v1568 = vadd.f32 %v1498, %v1567
      %v1569 = vpop.f32.mrb[0].mxu0
      %v1570 = vadd.f32 %v1503, %v1569
      %v1571 = vpop.f32.mrb[0].mxu0
      %v1572 = vadd.f32 %v1503, %v1571
      %1573 = vdwg.mxu0
      %v1574 = vmax.f32 %v1556, 0.0
      %v1575 = vmax.f32 %v1558, 0.0
      %v1576 = vmax.f32 %v1560, 0.0
      %v1577 = vmax.f32 %v1562, 0.0
      %v1578 = vmax.f32 %v1566, 0.0
      %v1579 = vmax.f32 %v1568, 0.0
      %v1580 = vmax.f32 %v1570, 0.0
      %v1581 = vmax.f32 %v1572, 0.0
      %v1582 = vpack.c.bf16 %v1576, %v1574
      %v1583 = vpack.c.bf16 %v1577, %v1575
      %v1584 = vpack.c.bf16 %v1580, %v1578
      %v1585 = vpack.c.bf16 %v1581, %v1579
      %v1586 = vld [vmem:[%s11] sm:$0xf]
      %v1587 = vld [vmem:[%s12] sm:$0xff]
      %1589 = vset.pattern.permute.xlu0 0
      %1590 = vperm.xlu0 %1589, %v1587
      %v1591 = vpop.permute.xlu0 %1590
      %vm1593 = vcmask 261120
      %v1595 = vsel %vm1593, %v1586, 0
      %1597 = vmatprep.subr.bf16.mxu0 %v1583
      %1598 = vmatpush1.bf16.msra.mxu0 %v1582
      %1599 = vmatprep.subr.bf16.mxu0 %v1585
      %1600 = vmatpush1.bf16.msra.mxu0 %v1584
      %1601 = vmatprep.subr.bf16.mxu0 0
      %1602 = vmatpush1.bf16.msra.mxu0 0
      %1603 = vmatprep.subr.bf16.mxu0 0
      %1604 = vmatpush1.bf16.msra.mxu0 0
      %1605 = vmatprep.subr.bf16.mxu0 0
      %1606 = vmatpush1.bf16.msra.mxu0 0
      %1607 = vmatprep.subr.bf16.mxu0 0
      %1608 = vmatpush1.bf16.msra.mxu0 0
      %1609 = vmatprep.subr.bf16.mxu0 0
      %1610 = vmatpush1.bf16.msra.mxu0 0
      %1611 = vmatprep.subr.bf16.mxu0 0
      %1612 = vmatpush1.bf16.msra.mxu0 0
      %1613 = vmatprep.subr.bf16.mxu0 0
      %1614 = vmatpush1.bf16.msra.mxu0 0
      %1615 = vmatprep.subr.bf16.mxu0 0
      %1616 = vmatpush1.bf16.msra.mxu0 0
      %1617 = vmatprep.subr.bf16.mxu0 0
      %1618 = vmatpush1.bf16.msra.mxu0 0
      %1619 = vmatprep.subr.bf16.mxu0 0
      %1620 = vmatpush1.bf16.msra.mxu0 0
      %1621 = vmatprep.subr.bf16.mxu0 0
      %1622 = vmatpush1.bf16.msra.mxu0 0
      %1623 = vmatprep.subr.bf16.mxu0 0
      %1624 = vmatpush1.bf16.msra.mxu0 0
      %1625 = vmatprep.subr.bf16.mxu0 0
      %1626 = vmatpush1.bf16.msra.mxu0 0
      %1627 = vmatprep.subr.bf16.mxu0 0
      %1628 = vmatpush1.bf16.msra.mxu0 0
      %1629 = vmatprep.mubr.bf16.mxu0 0
      %1630 = vmatmul.mubr.bf16.gmra.mrb[0].mxu0 %v1595
      %v1631 = vpop.f32.mrb[0].mxu0
      %v1632 = vadd.f32 %v1591, %v1631
      %v1633 = vpop.f32.mrb[0].mxu0
      %v1634 = vadd.f32 %v1591, %v1633
      %v1635 = vpop.f32.mrb[0].mxu0
      %v1636 = vpop.f32.mrb[0].mxu0
      %1637 = vdwg.mxu0
      %v1640 = vcombine.low %v1632, %v1634
      %v1642 = vunpack.c.l.s4 1966171168
      %v1643 = vunpack.c.0.s8 %v1642
      %v1644 = vlaneseq
      %v1645 = vshrl.u32 %v1644, 7
      %v1646 = vsub.s32 %v1643, %v1645
      %v1647 = vrot.slane %v1640, %v1646
      %v1649 = vunpack.c.l.s4 1966171168
      %v1650 = vunpack.c.0.s8 %v1649
      %v1651 = vlaneseq
      %v1652 = vshrl.u32 %v1651, 7
      %v1653 = vsub.s32 %v1650, %v1652
      %v1654 = vrot.slane %v1647, %v1653
      %v1656 = vlaneseq
      %vm1657 = vcmp.ge.s32.totalorder %v1656, 0
      %vm1658 = vcmp.lt.s32.totalorder %v1656, 256
      %vm1659 = vmand %vm1657, %vm1658
      %1660 = vst.msk [vmem:[%s440] sm:$0x3] %vm1659, %v1654
      %p1661 = scmp.lt.s32.totalorder %s24, 1
      %s1662 = scalar_select %p1661, %s24, 1
      %s1663 = smul.addr %s1662, 2
      %s1664 = scalar_lea.vmem %s13, %s1663
      // Predicated region
      $region73: #{static_surrogate_forward.1} parent=71 // pred_check
        %p1665 = pneg %p320
      $region74: #{static_surrogate_forward.1} parent=71 // pred_check_branch
        %1667 = sbr.rel (%p1665) target = $region76
      $region75: #{static_surrogate_forward.1} parent=71 // pred_region
        _
      $region76: #{static_surrogate_forward.1} parent=71 // pred_fallthru
        _
    $region72: #{static_surrogate_forward.1} parent=5 // pred_fallthru
      _
    %p1668 = scmp.le.s32.totalorder 2, %s19
    // Predicated region
    $region77: #{static_surrogate_forward.1} parent=5 // pred_check
      %p1669 = pneg %p1668
    $region78: #{static_surrogate_forward.1} parent=5 // pred_check_branch
      %1671 = sbr.rel (%p1669) target = $region80
    $region79: #{static_surrogate_forward.1} parent=5 // pred_region
      %s1672 = ssub.s32 %s19, 2
      // Predicated region
      $region81: #{static_surrogate_forward.1} parent=79 // pred_check
        %p1673 = pneg %p326
      $region82: #{static_surrogate_forward.1} parent=79 // pred_check_branch
        %1675 = sbr.rel (%p1673) target = $region84
      $region83: #{static_surrogate_forward.1} parent=79 // pred_region
        %p1676 = scmp.lt.s32.totalorder %s25, 1
        %s1677 = scalar_select %p1676, %s25, 1
        %s1678 = smul.addr %s1677, 2
        %s1679 = scalar_lea.vmem %s13, %s1678
      $region84: #{static_surrogate_forward.1} parent=79 // pred_fallthru
        _
    $region80: #{static_surrogate_forward.1} parent=5 // pred_fallthru
      _
  $region6: #{static_surrogate_forward.1} parent=0 // loop_footer
    %s23 = sadd.s32 1, %s19
  $region7: #{static_surrogate_forward.1} parent=0 // loop_footer_branch
    %18 = sbr.rel target = $region3
  $region8: #{static_surrogate_forward.1} parent=0 // loop_exit
    _

</llo_original>
